<compile_context>
chip_gen: v5e
topology: v5e:2x2
jax: 0.10.0
libtpu: 0.0.40
codegen_flags: <defaults>
</compile_context>

<pallas_src>
import functools
import numpy as np

import jax
import jax.numpy as jnp
from jax.experimental import pallas as pl
from jax.experimental.pallas import tpu as pltpu


# ----------------------------------------------------------------------------
# In-kernel helpers
# ----------------------------------------------------------------------------
def _double_norm(x, eps):
    """Norm('bn') branch: per-sample (x - mean)/(std + eps) over dim=1 then dim=0.

    torch.std is unbiased (ddof = 1); normalized dims must have size > 1.
    Exact divides here (review correctness item); approx reciprocal is only
    used for softmax denominators."""
    n_rows, n_cols = x.shape
    mean1 = jnp.mean(x, axis=1, keepdims=True)
    var1 = jnp.sum((x - mean1) ** 2, axis=1, keepdims=True) * (1.0 / (n_cols - 1))
    x1 = (x - mean1) / (jnp.sqrt(var1) + eps)
    mean0 = jnp.mean(x1, axis=0, keepdims=True)
    var0 = jnp.sum((x1 - mean0) ** 2, axis=0, keepdims=True) * (1.0 / (n_rows - 1))
    return (x1 - mean0) / (jnp.sqrt(var0) + eps)


def _softmax_last(logits):
    m = jnp.max(logits, axis=-1, keepdims=True)
    p = jnp.exp(logits - m)
    return p * pl.reciprocal(jnp.sum(p, axis=-1, keepdims=True), approx=True)


# ----------------------------------------------------------------------------
# Fused forward kernel, grid = (batch,)
# ----------------------------------------------------------------------------
def _fused_forward_kernel(x_ref, ctxp_ref, ctx_ref, adj_ref,
                          w_cb_ref, wt_a_ref,
                          lin_w_ref, lin_b_ref,
                          wq_ref, wv_ref, bq_ref, bk_ref, bv_ref,
                          out_w_ref, out_b_ref,
                          o_ref, asm_ref, *, nheads, alpha, eps):
    xb = x_ref[0]        # (Nt, E)  target features
    cb = ctxp_ref[0]     # (Ns, E)  ctx_with_pos (graph source / MHA key input)
    vb = ctx_ref[0]      # (Ns, E)  ctx (MHA value input)
    adjb = adj_ref[0]    # (Nt, Ns)
    Nt, E = xb.shape
    Ns = cb.shape[0]
    H = nheads
    F = E // H           # per-head width (GAT out_features == MHA head_dim)
    neg_big = jnp.float32(-9.0e15)

    # ---- 1) GraphEncoderDecoderAttentionLayer heads -------------------------
    # ONE MXU pass over ctx_with_pos for [Ws_cat | Wk^T | Ws_cat@A_src].
    src_all = jnp.dot(cb, w_cb_ref[...], preferred_element_type=jnp.float32)  # (Ns, 2E+H)
    ws_ctx = src_all[:, :E]                        # (Ns, E) ctx @ Ws, heads concatenated
    k_mha = src_all[:, E:2 * E] + bk_ref[...]      # (Ns, E) MHA keys, reused in stage 3
    es_all = src_all[:, 2 * E:]                    # (Ns, H) a_h[:F] . Ws_ctx_h (folded)
    # Folded target side: (x @ Wt_cat) @ A_tgt == x @ (Wt_cat @ A_tgt).
    et_T = jnp.dot(xb, wt_a_ref[...], preferred_element_type=jnp.float32).T   # (H, Nt)

    for h in range(H):
        es = es_all[:, h:h + 1]                    # (Ns, 1)
        et = et_T[h:h + 1, :]                      # (1, Nt)
        # torch repeat_interleave / repeat / view index scramble:
        #   e[i, j] = es[(i*Ns+j)//Nt] + et[(i*Ns+j)%Nt]
        # == row-major (Ns, Nt) outer-sum buffer reinterpreted as (Nt, Ns).
        # The reshape is the identity when Ns == Nt (the case here); only for
        # Ns != Nt is it a real relayout (then hoist it by stacking heads).
        e_pre = (es + et).reshape(Nt, Ns)
        e = jnp.where(e_pre > 0, e_pre, alpha * e_pre)         # LeakyReLU(alpha)
        logits = jnp.where(adjb > 0, e, neg_big)
        att = _softmax_last(logits)                            # (Nt, Ns)
        # TODO(synk): attention dropout treated as identity (eval semantics).
        # Head-h output block -> lanes [h*F, (h+1)*F) of the assembly scratch
        # (no iota masks, no wasted full-width matmul columns).
        asm_ref[:, h * F:(h + 1) * F] = jnp.dot(
            att, ws_ctx[:, h * F:(h + 1) * F], preferred_element_type=jnp.float32)
    hp = asm_ref[...]                                          # (Nt, E) concat of heads
    hp = jnp.where(hp > 0, hp, 0.01 * hp)                      # F.leaky_relu default slope

    # ---- 2) residual + norm1 + linear + norm2 --------------------------------
    x1 = xb + hp
    x2 = _double_norm(x1, eps)
    x3 = jnp.dot(x2, lin_w_ref[...], preferred_element_type=jnp.float32) + lin_b_ref[...]
    x4 = _double_norm(x3, eps)

    # ---- 3) nn.MultiheadAttention(q=x4, k=ctx_with_pos, v=ctx) + out_proj ----
    # 1/sqrt(head_dim) is folded into wq/bq at init; K transposed ONCE.
    q = jnp.dot(x4, wq_ref[...], preferred_element_type=jnp.float32) + bq_ref[...]  # (Nt, E)
    v = jnp.dot(vb, wv_ref[...], preferred_element_type=jnp.float32) + bv_ref[...]  # (Ns, E)
    kT = k_mha.T                                                                    # (E, Ns)
    for h in range(H):
        lo, hi = h * F, (h + 1) * F
        s = jnp.dot(q[:, lo:hi], kT[lo:hi, :], preferred_element_type=jnp.float32)  # (Nt, Ns)
        p = _softmax_last(s)
        # TODO(synk): attention dropout treated as identity (eval semantics).
        asm_ref[:, lo:hi] = jnp.dot(p, v[:, lo:hi], preferred_element_type=jnp.float32)
    # Heads assembled lane-contiguously -> ONE output-projection matmul.
    o_ref[0] = (jnp.dot(asm_ref[...], out_w_ref[...], preferred_element_type=jnp.float32)
                + out_b_ref[...])


# ----------------------------------------------------------------------------
# Parameters (deterministic, synthetic) — folded / fused layouts
# ----------------------------------------------------------------------------
def init_params(key, nhid, nheads):
    assert nhid % nheads == 0
    f_out = nhid // nheads
    ks = jax.random.split(key, 9)

    def xavier(k, shape, gain=1.414):
        fan_in, fan_out = shape[-2], shape[-1]
        limit = gain * np.sqrt(6.0 / (fan_in + fan_out))
        return jax.random.uniform(k, shape, jnp.float32, -limit, limit)

    Ws = xavier(ks[0], (nheads, nhid, f_out))              # per-head Ws
    Wt = xavier(ks[1], (nheads, nhid, f_out))              # per-head Wt
    a = xavier(ks[2], (nheads, 2 * f_out, 1))              # per-head a (2F, 1)

    # Heads concatenated along the output-feature axis.
    Ws_cat = jnp.concatenate([Ws[h] for h in range(nheads)], axis=1)   # (nhid, nhid)
    Wt_cat = jnp.concatenate([Wt[h] for h in range(nheads)], axis=1)   # (nhid, nhid)

    # Fold the per-head attention vectors straight into the weights:
    #   es[s,h] = a_h[:F] . (ctx@Ws_h)[s]  ==  (ctx @ (Ws_cat@A_src))[s,h]
    #   et[t,h] = a_h[F:] . (x  @Wt_h)[t]  ==  (x   @ (Wt_cat@A_tgt))[t,h]
    A_src = jnp.zeros((nhid, nheads), jnp.float32)
    A_tgt = jnp.zeros((nhid, nheads), jnp.float32)
    for h in range(nheads):
        A_src = A_src.at[h * f_out:(h + 1) * f_out, h].set(a[h, :f_out, 0])
        A_tgt = A_tgt.at[h * f_out:(h + 1) * f_out, h].set(a[h, f_out:, 0])
    Ws_a = Ws_cat @ A_src                                  # (nhid, H)
    Wt_a = Wt_cat @ A_tgt                                  # (nhid, H)

    lin_w = xavier(ks[3], (nhid, nhid), gain=1.0)          # nn.Linear weight (out, in)
    lin_b = jax.random.uniform(ks[4], (1, nhid), jnp.float32, -0.1, 0.1)

    in_proj_w = xavier(ks[5], (3 * nhid, nhid), gain=1.0)  # MHA in_proj_weight
    in_proj_b = jax.random.uniform(ks[6], (3 * nhid,), jnp.float32, -0.1, 0.1)
    Wq, Wk, Wv = in_proj_w[:nhid], in_proj_w[nhid:2 * nhid], in_proj_w[2 * nhid:]
    scale = 1.0 / float(np.sqrt(nhid // nheads))
    wq_t_scaled = Wq.T * scale                             # fold 1/sqrt(hd) into Wq
    bq_scaled = (in_proj_b[:nhid] * scale).reshape(1, nhid)
    bk = in_proj_b[nhid:2 * nhid].reshape(1, nhid)
    bv = in_proj_b[2 * nhid:].reshape(1, nhid)

    out_w = xavier(ks[7], (nhid, nhid), gain=1.0)          # MHA out_proj weight (out, in)
    out_b = jax.random.uniform(ks[8], (1, nhid), jnp.float32, -0.1, 0.1)

    # Fuse the three matmuls that share ctx_with_pos as LHS into one RHS:
    # one MXU pass over cb yields [Ws_ctx | K | es_all].
    w_cb = jnp.concatenate([Ws_cat, Wk.T, Ws_a], axis=1)   # (nhid, 2*nhid + H)

    return dict(
        w_cb=w_cb, wt_a=Wt_a,
        lin_w_t=lin_w.T, lin_b=lin_b,
        wq_t_scaled=wq_t_scaled, wv_t=Wv.T,
        bq_scaled=bq_scaled, bk=bk, bv=bv,
        out_w_t=out_w.T, out_b=out_b,
    )


# ----------------------------------------------------------------------------
# Full forward: a single pallas_call over the batch
# ----------------------------------------------------------------------------
@functools.partial(jax.jit,
                   static_argnames=("nheads", "alpha", "single_buffer_weights"))
def graph_encoder_decoder_attention(params, x, ctx_with_pos, ctx, src, adj, *,
                                    nheads, alpha=0.1,
                                    single_buffer_weights=False):
    del src  # unused in the reference forward
    B, Nt, nhid = x.shape
    Ns = ctx_with_pos.shape[1]
    H = nheads

    def batch_spec(n, c):
        return pl.BlockSpec((1, n, c), lambda b: (b, 0, 0))

    # Batch-invariant weights: their block index never changes with b, so they
    # are DMA'd once.  On v7x at production nhid (64 MiB VMEM) enable
    # single_buffer_weights=True to also halve their VMEM footprint.
    const_kwargs = {}
    if single_buffer_weights and hasattr(pl, "Buffered"):
        const_kwargs = dict(pipeline_mode=pl.Buffered(1))

    def const_spec(shape):
        return pl.BlockSpec(shape, lambda b: (0, 0), **const_kwargs)

    kernel = functools.partial(_fused_forward_kernel,
                               nheads=nheads, alpha=alpha, eps=1e-6)
    return pl.pallas_call(
        kernel,
        out_shape=jax.ShapeDtypeStruct((B, Nt, nhid), jnp.float32),
        grid=(B,),
        in_specs=[
            batch_spec(Nt, nhid),                  # x
            batch_spec(Ns, nhid),                  # ctx_with_pos
            batch_spec(Ns, nhid),                  # ctx
            batch_spec(Nt, Ns),                    # adj
            const_spec((nhid, 2 * nhid + H)),      # w_cb = [Ws_cat | Wk^T | Ws_cat@A_src]
            const_spec((nhid, H)),                 # wt_a = Wt_cat @ A_tgt
            const_spec((nhid, nhid)),              # lin_w_t
            const_spec((1, nhid)),                 # lin_b
            const_spec((nhid, nhid)),              # wq_t (scale folded in)
            const_spec((nhid, nhid)),              # wv_t
            const_spec((1, nhid)),                 # bq (scale folded in)
            const_spec((1, nhid)),                 # bk
            const_spec((1, nhid)),                 # bv
            const_spec((nhid, nhid)),              # out_w_t
            const_spec((1, nhid)),                 # out_b
        ],
        out_specs=pl.BlockSpec((1, Nt, nhid), lambda b: (b, 0, 0)),
        # Small head-assembly buffer, reused by the GAT and MHA stages.
        scratch_shapes=[pltpu.VMEM((Nt, nhid), jnp.float32)],
        compiler_params=pltpu.CompilerParams(
            # grid=(B,) with even B keeps both v7x TensorCores busy (one batch
            # per TC); on v5e/v6e (single TC) this is a no-op.
            dimension_semantics=("parallel",),
            vmem_limit_bytes=32 * 1024 * 1024),
    )(x, ctx_with_pos, ctx, adj,
      params["w_cb"], params["wt_a"],
      params["lin_w_t"], params["lin_b"],
      params["wq_t_scaled"], params["wv_t"],
      params["bq_scaled"], params["bk"], params["bv"],
      params["out_w_t"], params["out_b"])


if __name__ == "__main__":
    B, NT, NS, NHID, NHEADS = 2, 8, 8, 32, 4
    key = jax.random.PRNGKey(0)
    kx, kcp, kc, ks, ka, kp = jax.random.split(key, 6)

    x = jax.random.normal(kx, (B, NT, NHID), jnp.float32)
    ctx_with_pos = jax.random.normal(kcp, (B, NS, NHID), jnp.float32)
    ctx = jax.random.normal(kc, (B, NS, NHID), jnp.float32)
    src = jax.random.normal(ks, (B, NS, NHID), jnp.float32)   # unused by forward
    adj = (jax.random.uniform(ka, (B, NT, NS)) > 0.3).astype(jnp.float32)

    params = init_params(kp, NHID, NHEADS)

    out = graph_encoder_decoder_attention(params, x, ctx_with_pos, ctx, src, adj,
                                          nheads=NHEADS, alpha=0.1)
    out = jax.block_until_ready(out)
    assert out.shape == (B, NT, NHID) and out.dtype == jnp.float32
    assert bool(jnp.all(jnp.isfinite(out)))
    print("KERNEL_OK")
</pallas_src>

<mosaic_0001>
module attributes {stable_mosaic.version = 11 : i64} {
  func.func @_fused_forward_kernel(%arg0: i32, %arg1: memref<1x8x32xf32, #tpu.memory_space<vmem>>, %arg2: memref<1x8x32xf32, #tpu.memory_space<vmem>>, %arg3: memref<1x8x32xf32, #tpu.memory_space<vmem>>, %arg4: memref<1x8x8xf32, #tpu.memory_space<vmem>>, %arg5: memref<32x68xf32, #tpu.memory_space<vmem>>, %arg6: memref<32x4xf32, #tpu.memory_space<vmem>>, %arg7: memref<32x32xf32, #tpu.memory_space<vmem>>, %arg8: memref<1x32xf32, #tpu.memory_space<vmem>>, %arg9: memref<32x32xf32, #tpu.memory_space<vmem>>, %arg10: memref<32x32xf32, #tpu.memory_space<vmem>>, %arg11: memref<1x32xf32, #tpu.memory_space<vmem>>, %arg12: memref<1x32xf32, #tpu.memory_space<vmem>>, %arg13: memref<1x32xf32, #tpu.memory_space<vmem>>, %arg14: memref<32x32xf32, #tpu.memory_space<vmem>>, %arg15: memref<1x32xf32, #tpu.memory_space<vmem>>, %arg16: memref<1x8x32xf32, #tpu.memory_space<vmem>>, %arg17: memref<8x32xf32, #tpu.memory_space<vmem>>) attributes {dimension_semantics = [#tpu.dimension_semantics<parallel>], iteration_bounds = array<i64: 2>, scalar_prefetch = 0 : i64, scratch_operands = 1 : i64, tpu.core_type = #tpu.core_type<tc>, window_params = [{transform_indices = @transform_0, window_bounds = array<i64: 1, 8, 32>}, {transform_indices = @transform_1, window_bounds = array<i64: 1, 8, 32>}, {transform_indices = @transform_2, window_bounds = array<i64: 1, 8, 32>}, {transform_indices = @transform_3, window_bounds = array<i64: 1, 8, 8>}, {pipeline_mode = #tpu.pipeline_mode<synchronous>, transform_indices = @transform_4, window_bounds = array<i64: 32, 68>}, {pipeline_mode = #tpu.pipeline_mode<synchronous>, transform_indices = @transform_5, window_bounds = array<i64: 32, 4>}, {pipeline_mode = #tpu.pipeline_mode<synchronous>, transform_indices = @transform_6, window_bounds = array<i64: 32, 32>}, {pipeline_mode = #tpu.pipeline_mode<synchronous>, transform_indices = @transform_7, window_bounds = array<i64: 1, 32>}, {pipeline_mode = #tpu.pipeline_mode<synchronous>, transform_indices = @transform_8, window_bounds = array<i64: 32, 32>}, {pipeline_mode = #tpu.pipeline_mode<synchronous>, transform_indices = @transform_9, window_bounds = array<i64: 32, 32>}, {pipeline_mode = #tpu.pipeline_mode<synchronous>, transform_indices = @transform_10, window_bounds = array<i64: 1, 32>}, {pipeline_mode = #tpu.pipeline_mode<synchronous>, transform_indices = @transform_11, window_bounds = array<i64: 1, 32>}, {pipeline_mode = #tpu.pipeline_mode<synchronous>, transform_indices = @transform_12, window_bounds = array<i64: 1, 32>}, {pipeline_mode = #tpu.pipeline_mode<synchronous>, transform_indices = @transform_13, window_bounds = array<i64: 32, 32>}, {pipeline_mode = #tpu.pipeline_mode<synchronous>, transform_indices = @transform_14, window_bounds = array<i64: 1, 32>}, {transform_indices = @transform_15, window_bounds = array<i64: 1, 8, 32>}]} {
    %c0 = arith.constant 0 : index
    %c0_0 = arith.constant 0 : index
    %c0_1 = arith.constant 0 : index
    %0 = vector.load %arg1[%c0, %c0_0, %c0_1] : memref<1x8x32xf32, #tpu.memory_space<vmem>>, vector<1x8x32xf32>
    %1 = vector.shape_cast %0 : vector<1x8x32xf32> to vector<8x32xf32>
    %c0_2 = arith.constant 0 : index
    %c0_3 = arith.constant 0 : index
    %c0_4 = arith.constant 0 : index
    %2 = vector.load %arg2[%c0_2, %c0_3, %c0_4] : memref<1x8x32xf32, #tpu.memory_space<vmem>>, vector<1x8x32xf32>
    %3 = vector.shape_cast %2 : vector<1x8x32xf32> to vector<8x32xf32>
    %c0_5 = arith.constant 0 : index
    %c0_6 = arith.constant 0 : index
    %c0_7 = arith.constant 0 : index
    %4 = vector.load %arg3[%c0_5, %c0_6, %c0_7] : memref<1x8x32xf32, #tpu.memory_space<vmem>>, vector<1x8x32xf32>
    %5 = vector.shape_cast %4 : vector<1x8x32xf32> to vector<8x32xf32>
    %c0_8 = arith.constant 0 : index
    %c0_9 = arith.constant 0 : index
    %c0_10 = arith.constant 0 : index
    %6 = vector.load %arg4[%c0_8, %c0_9, %c0_10] : memref<1x8x8xf32, #tpu.memory_space<vmem>>, vector<1x8x8xf32>
    %7 = vector.shape_cast %6 : vector<1x8x8xf32> to vector<8x8xf32>
    %c0_11 = arith.constant 0 : index
    %c0_12 = arith.constant 0 : index
    %8 = vector.load %arg5[%c0_11, %c0_12] : memref<32x68xf32, #tpu.memory_space<vmem>>, vector<32x68xf32>
    %cst = arith.constant dense<0.000000e+00> : vector<8x68xf32>
    %9 = tpu.matmul %3, %8, %cst {dimension_numbers = #tpu.dot_dimension_numbers<[1], [0], [0], [1], [0, 0, 1, 1], [], []>} : vector<8x32xf32>, vector<32x68xf32>, vector<8x68xf32> -> vector<8x68xf32>
    %10 = vector.extract_strided_slice %9 {offsets = [0, 0], sizes = [8, 32], strides = [1, 1]} : vector<8x68xf32> to vector<8x32xf32>
    %11 = vector.extract_strided_slice %9 {offsets = [0, 32], sizes = [8, 32], strides = [1, 1]} : vector<8x68xf32> to vector<8x32xf32>
    %c0_13 = arith.constant 0 : index
    %c0_14 = arith.constant 0 : index
    %12 = vector.load %arg12[%c0_13, %c0_14] : memref<1x32xf32, #tpu.memory_space<vmem>>, vector<1x32xf32>
    %13 = vector.broadcast %12 : vector<1x32xf32> to vector<8x32xf32>
    %14 = arith.addf %11, %13 : vector<8x32xf32>
    %15 = vector.extract_strided_slice %9 {offsets = [0, 64], sizes = [8, 4], strides = [1, 1]} : vector<8x68xf32> to vector<8x4xf32>
    %c0_15 = arith.constant 0 : index
    %c0_16 = arith.constant 0 : index
    %16 = vector.load %arg6[%c0_15, %c0_16] : memref<32x4xf32, #tpu.memory_space<vmem>>, vector<32x4xf32>
    %cst_17 = arith.constant dense<0.000000e+00> : vector<8x4xf32>
    %17 = tpu.matmul %1, %16, %cst_17 {dimension_numbers = #tpu.dot_dimension_numbers<[1], [0], [0], [1], [0, 0, 1, 1], [], []>} : vector<8x32xf32>, vector<32x4xf32>, vector<8x4xf32> -> vector<8x4xf32>
    %18 = tpu.transpose %17, [1, 0] : vector<8x4xf32> -> vector<4x8xf32>
    %19 = vector.extract_strided_slice %15 {offsets = [0, 0], sizes = [8, 1], strides = [1, 1]} : vector<8x4xf32> to vector<8x1xf32>
    %20 = vector.extract_strided_slice %18 {offsets = [0, 0], sizes = [1, 8], strides = [1, 1]} : vector<4x8xf32> to vector<1x8xf32>
    %21 = vector.broadcast %19 : vector<8x1xf32> to vector<8x8xf32>
    %22 = vector.broadcast %20 : vector<1x8xf32> to vector<8x8xf32>
    %23 = arith.addf %21, %22 : vector<8x8xf32>
    %cst_18 = arith.constant 0.000000e+00 : f32
    %24 = vector.broadcast %cst_18 : f32 to vector<8x8xf32>
    %25 = arith.cmpf ogt, %23, %24 : vector<8x8xf32>
    %cst_19 = arith.constant 1.000000e-01 : f32
    %26 = vector.broadcast %cst_19 : f32 to vector<8x8xf32>
    %27 = arith.mulf %26, %23 : vector<8x8xf32>
    %28 = arith.select %25, %23, %27 : vector<8x8xi1>, vector<8x8xf32>
    %cst_20 = arith.constant 0.000000e+00 : f32
    %29 = vector.broadcast %cst_20 : f32 to vector<8x8xf32>
    %30 = arith.cmpf ogt, %7, %29 : vector<8x8xf32>
    %cst_21 = arith.constant -9.000000e+15 : f32
    %31 = vector.broadcast %cst_21 : f32 to vector<8x8xf32>
    %32 = arith.select %30, %28, %31 : vector<8x8xi1>, vector<8x8xf32>
    %cst_22 = arith.constant dense<0xFF800000> : vector<8xf32>
    %33 = vector.multi_reduction <maximumf>, %32, %cst_22 [1] : vector<8x8xf32> to vector<8xf32>
    %34 = vector.shape_cast %33 : vector<8xf32> to vector<8x1xf32>
    %35 = vector.broadcast %34 : vector<8x1xf32> to vector<8x8xf32>
    %36 = arith.subf %32, %35 : vector<8x8xf32>
    %37 = math.exp %36 : vector<8x8xf32>
    %cst_23 = arith.constant dense<0.000000e+00> : vector<8xf32>
    %38 = vector.multi_reduction <add>, %37, %cst_23 [1] : vector<8x8xf32> to vector<8xf32>
    %39 = vector.shape_cast %38 : vector<8xf32> to vector<8x1xf32>
    %40 = tpu.reciprocal %39 {approx = true} : vector<8x1xf32> -> vector<8x1xf32>
    %41 = vector.broadcast %40 : vector<8x1xf32> to vector<8x8xf32>
    %42 = arith.mulf %37, %41 : vector<8x8xf32>
    %43 = vector.extract_strided_slice %10 {offsets = [0, 0], sizes = [8, 8], strides = [1, 1]} : vector<8x32xf32> to vector<8x8xf32>
    %cst_24 = arith.constant dense<0.000000e+00> : vector<8x8xf32>
    %44 = tpu.matmul %42, %43, %cst_24 {dimension_numbers = #tpu.dot_dimension_numbers<[1], [0], [0], [1], [0, 0, 1, 1], [], []>} : vector<8x8xf32>, vector<8x8xf32>, vector<8x8xf32> -> vector<8x8xf32>
    %c0_25 = arith.constant 0 : index
    %c0_26 = arith.constant 0 : index
    %45 = vector.load %arg17[%c0_25, %c0_26] : memref<8x32xf32, #tpu.memory_space<vmem>>, vector<8x8xf32>
    tpu.vector_store %arg17[%c0_25, %c0_26], %44 {strides = array<i32>} : memref<8x32xf32, #tpu.memory_space<vmem>>, vector<8x8xf32>,
    %46 = vector.extract_strided_slice %15 {offsets = [0, 1], sizes = [8, 1], strides = [1, 1]} : vector<8x4xf32> to vector<8x1xf32>
    %47 = vector.extract_strided_slice %18 {offsets = [1, 0], sizes = [1, 8], strides = [1, 1]} : vector<4x8xf32> to vector<1x8xf32>
    %48 = vector.broadcast %46 : vector<8x1xf32> to vector<8x8xf32>
    %49 = vector.broadcast %47 : vector<1x8xf32> to vector<8x8xf32>
    %50 = arith.addf %48, %49 : vector<8x8xf32>
    %cst_27 = arith.constant 0.000000e+00 : f32
    %51 = vector.broadcast %cst_27 : f32 to vector<8x8xf32>
    %52 = arith.cmpf ogt, %50, %51 : vector<8x8xf32>
    %cst_28 = arith.constant 1.000000e-01 : f32
    %53 = vector.broadcast %cst_28 : f32 to vector<8x8xf32>
    %54 = arith.mulf %53, %50 : vector<8x8xf32>
    %55 = arith.select %52, %50, %54 : vector<8x8xi1>, vector<8x8xf32>
    %cst_29 = arith.constant 0.000000e+00 : f32
    %56 = vector.broadcast %cst_29 : f32 to vector<8x8xf32>
    %57 = arith.cmpf ogt, %7, %56 : vector<8x8xf32>
    %cst_30 = arith.constant -9.000000e+15 : f32
    %58 = vector.broadcast %cst_30 : f32 to vector<8x8xf32>
    %59 = arith.select %57, %55, %58 : vector<8x8xi1>, vector<8x8xf32>
    %cst_31 = arith.constant dense<0xFF800000> : vector<8xf32>
    %60 = vector.multi_reduction <maximumf>, %59, %cst_31 [1] : vector<8x8xf32> to vector<8xf32>
    %61 = vector.shape_cast %60 : vector<8xf32> to vector<8x1xf32>
    %62 = vector.broadcast %61 : vector<8x1xf32> to vector<8x8xf32>
    %63 = arith.subf %59, %62 : vector<8x8xf32>
    %64 = math.exp %63 : vector<8x8xf32>
    %cst_32 = arith.constant dense<0.000000e+00> : vector<8xf32>
    %65 = vector.multi_reduction <add>, %64, %cst_32 [1] : vector<8x8xf32> to vector<8xf32>
    %66 = vector.shape_cast %65 : vector<8xf32> to vector<8x1xf32>
    %67 = tpu.reciprocal %66 {approx = true} : vector<8x1xf32> -> vector<8x1xf32>
    %68 = vector.broadcast %67 : vector<8x1xf32> to vector<8x8xf32>
    %69 = arith.mulf %64, %68 : vector<8x8xf32>
    %70 = vector.extract_strided_slice %10 {offsets = [0, 8], sizes = [8, 8], strides = [1, 1]} : vector<8x32xf32> to vector<8x8xf32>
    %cst_33 = arith.constant dense<0.000000e+00> : vector<8x8xf32>
    %71 = tpu.matmul %69, %70, %cst_33 {dimension_numbers = #tpu.dot_dimension_numbers<[1], [0], [0], [1], [0, 0, 1, 1], [], []>} : vector<8x8xf32>, vector<8x8xf32>, vector<8x8xf32> -> vector<8x8xf32>
    %c0_34 = arith.constant 0 : index
    %c8 = arith.constant 8 : index
    %72 = vector.load %arg17[%c0_34, %c8] : memref<8x32xf32, #tpu.memory_space<vmem>>, vector<8x8xf32>
    tpu.vector_store %arg17[%c0_34, %c8], %71 {strides = array<i32>} : memref<8x32xf32, #tpu.memory_space<vmem>>, vector<8x8xf32>,
    %73 = vector.extract_strided_slice %15 {offsets = [0, 2], sizes = [8, 1], strides = [1, 1]} : vector<8x4xf32> to vector<8x1xf32>
    %74 = vector.extract_strided_slice %18 {offsets = [2, 0], sizes = [1, 8], strides = [1, 1]} : vector<4x8xf32> to vector<1x8xf32>
    %75 = vector.broadcast %73 : vector<8x1xf32> to vector<8x8xf32>
    %76 = vector.broadcast %74 : vector<1x8xf32> to vector<8x8xf32>
    %77 = arith.addf %75, %76 : vector<8x8xf32>
    %cst_35 = arith.constant 0.000000e+00 : f32
    %78 = vector.broadcast %cst_35 : f32 to vector<8x8xf32>
    %79 = arith.cmpf ogt, %77, %78 : vector<8x8xf32>
    %cst_36 = arith.constant 1.000000e-01 : f32
    %80 = vector.broadcast %cst_36 : f32 to vector<8x8xf32>
    %81 = arith.mulf %80, %77 : vector<8x8xf32>
    %82 = arith.select %79, %77, %81 : vector<8x8xi1>, vector<8x8xf32>
    %cst_37 = arith.constant 0.000000e+00 : f32
    %83 = vector.broadcast %cst_37 : f32 to vector<8x8xf32>
    %84 = arith.cmpf ogt, %7, %83 : vector<8x8xf32>
    %cst_38 = arith.constant -9.000000e+15 : f32
    %85 = vector.broadcast %cst_38 : f32 to vector<8x8xf32>
    %86 = arith.select %84, %82, %85 : vector<8x8xi1>, vector<8x8xf32>
    %cst_39 = arith.constant dense<0xFF800000> : vector<8xf32>
    %87 = vector.multi_reduction <maximumf>, %86, %cst_39 [1] : vector<8x8xf32> to vector<8xf32>
    %88 = vector.shape_cast %87 : vector<8xf32> to vector<8x1xf32>
    %89 = vector.broadcast %88 : vector<8x1xf32> to vector<8x8xf32>
    %90 = arith.subf %86, %89 : vector<8x8xf32>
    %91 = math.exp %90 : vector<8x8xf32>
    %cst_40 = arith.constant dense<0.000000e+00> : vector<8xf32>
    %92 = vector.multi_reduction <add>, %91, %cst_40 [1] : vector<8x8xf32> to vector<8xf32>
    %93 = vector.shape_cast %92 : vector<8xf32> to vector<8x1xf32>
    %94 = tpu.reciprocal %93 {approx = true} : vector<8x1xf32> -> vector<8x1xf32>
    %95 = vector.broadcast %94 : vector<8x1xf32> to vector<8x8xf32>
    %96 = arith.mulf %91, %95 : vector<8x8xf32>
    %97 = vector.extract_strided_slice %10 {offsets = [0, 16], sizes = [8, 8], strides = [1, 1]} : vector<8x32xf32> to vector<8x8xf32>
    %cst_41 = arith.constant dense<0.000000e+00> : vector<8x8xf32>
    %98 = tpu.matmul %96, %97, %cst_41 {dimension_numbers = #tpu.dot_dimension_numbers<[1], [0], [0], [1], [0, 0, 1, 1], [], []>} : vector<8x8xf32>, vector<8x8xf32>, vector<8x8xf32> -> vector<8x8xf32>
    %c0_42 = arith.constant 0 : index
    %c16 = arith.constant 16 : index
    %99 = vector.load %arg17[%c0_42, %c16] : memref<8x32xf32, #tpu.memory_space<vmem>>, vector<8x8xf32>
    tpu.vector_store %arg17[%c0_42, %c16], %98 {strides = array<i32>} : memref<8x32xf32, #tpu.memory_space<vmem>>, vector<8x8xf32>,
    %100 = vector.extract_strided_slice %15 {offsets = [0, 3], sizes = [8, 1], strides = [1, 1]} : vector<8x4xf32> to vector<8x1xf32>
    %101 = vector.extract_strided_slice %18 {offsets = [3, 0], sizes = [1, 8], strides = [1, 1]} : vector<4x8xf32> to vector<1x8xf32>
    %102 = vector.broadcast %100 : vector<8x1xf32> to vector<8x8xf32>
    %103 = vector.broadcast %101 : vector<1x8xf32> to vector<8x8xf32>
    %104 = arith.addf %102, %103 : vector<8x8xf32>
    %cst_43 = arith.constant 0.000000e+00 : f32
    %105 = vector.broadcast %cst_43 : f32 to vector<8x8xf32>
    %106 = arith.cmpf ogt, %104, %105 : vector<8x8xf32>
    %cst_44 = arith.constant 1.000000e-01 : f32
    %107 = vector.broadcast %cst_44 : f32 to vector<8x8xf32>
    %108 = arith.mulf %107, %104 : vector<8x8xf32>
    %109 = arith.select %106, %104, %108 : vector<8x8xi1>, vector<8x8xf32>
    %cst_45 = arith.constant 0.000000e+00 : f32
    %110 = vector.broadcast %cst_45 : f32 to vector<8x8xf32>
    %111 = arith.cmpf ogt, %7, %110 : vector<8x8xf32>
    %cst_46 = arith.constant -9.000000e+15 : f32
    %112 = vector.broadcast %cst_46 : f32 to vector<8x8xf32>
    %113 = arith.select %111, %109, %112 : vector<8x8xi1>, vector<8x8xf32>
    %cst_47 = arith.constant dense<0xFF800000> : vector<8xf32>
    %114 = vector.multi_reduction <maximumf>, %113, %cst_47 [1] : vector<8x8xf32> to vector<8xf32>
    %115 = vector.shape_cast %114 : vector<8xf32> to vector<8x1xf32>
    %116 = vector.broadcast %115 : vector<8x1xf32> to vector<8x8xf32>
    %117 = arith.subf %113, %116 : vector<8x8xf32>
    %118 = math.exp %117 : vector<8x8xf32>
    %cst_48 = arith.constant dense<0.000000e+00> : vector<8xf32>
    %119 = vector.multi_reduction <add>, %118, %cst_48 [1] : vector<8x8xf32> to vector<8xf32>
    %120 = vector.shape_cast %119 : vector<8xf32> to vector<8x1xf32>
    %121 = tpu.reciprocal %120 {approx = true} : vector<8x1xf32> -> vector<8x1xf32>
    %122 = vector.broadcast %121 : vector<8x1xf32> to vector<8x8xf32>
    %123 = arith.mulf %118, %122 : vector<8x8xf32>
    %124 = vector.extract_strided_slice %10 {offsets = [0, 24], sizes = [8, 8], strides = [1, 1]} : vector<8x32xf32> to vector<8x8xf32>
    %cst_49 = arith.constant dense<0.000000e+00> : vector<8x8xf32>
    %125 = tpu.matmul %123, %124, %cst_49 {dimension_numbers = #tpu.dot_dimension_numbers<[1], [0], [0], [1], [0, 0, 1, 1], [], []>} : vector<8x8xf32>, vector<8x8xf32>, vector<8x8xf32> -> vector<8x8xf32>
    %c0_50 = arith.constant 0 : index
    %c24 = arith.constant 24 : index
    %126 = vector.load %arg17[%c0_50, %c24] : memref<8x32xf32, #tpu.memory_space<vmem>>, vector<8x8xf32>
    tpu.vector_store %arg17[%c0_50, %c24], %125 {strides = array<i32>} : memref<8x32xf32, #tpu.memory_space<vmem>>, vector<8x8xf32>,
    %c0_51 = arith.constant 0 : index
    %c0_52 = arith.constant 0 : index
    %127 = vector.load %arg17[%c0_51, %c0_52] : memref<8x32xf32, #tpu.memory_space<vmem>>, vector<8x32xf32>
    %cst_53 = arith.constant 0.000000e+00 : f32
    %128 = vector.broadcast %cst_53 : f32 to vector<8x32xf32>
    %129 = arith.cmpf ogt, %127, %128 : vector<8x32xf32>
    %cst_54 = arith.constant 0.00999999977 : f32
    %130 = vector.broadcast %cst_54 : f32 to vector<8x32xf32>
    %131 = arith.mulf %130, %127 : vector<8x32xf32>
    %132 = arith.select %129, %127, %131 : vector<8x32xi1>, vector<8x32xf32>
    %133 = arith.addf %1, %132 : vector<8x32xf32>
    %cst_55 = arith.constant dense<0.000000e+00> : vector<8xf32>
    %134 = vector.multi_reduction <add>, %133, %cst_55 [1] : vector<8x32xf32> to vector<8xf32>
    %135 = vector.shape_cast %134 : vector<8xf32> to vector<8x1xf32>
    %cst_56 = arith.constant 3.200000e+01 : f32
    %136 = vector.broadcast %cst_56 : f32 to vector<8x1xf32>
    %137 = arith.divf %135, %136 : vector<8x1xf32>
    %138 = vector.broadcast %137 : vector<8x1xf32> to vector<8x32xf32>
    %139 = arith.subf %133, %138 : vector<8x32xf32>
    %140 = arith.mulf %139, %139 : vector<8x32xf32>
    %cst_57 = arith.constant dense<0.000000e+00> : vector<8xf32>
    %141 = vector.multi_reduction <add>, %140, %cst_57 [1] : vector<8x32xf32> to vector<8xf32>
    %142 = vector.shape_cast %141 : vector<8xf32> to vector<8x1xf32>
    %cst_58 = arith.constant 0.0322580636 : f32
    %143 = vector.broadcast %cst_58 : f32 to vector<8x1xf32>
    %144 = arith.mulf %142, %143 : vector<8x1xf32>
    %145 = vector.broadcast %137 : vector<8x1xf32> to vector<8x32xf32>
    %146 = arith.subf %133, %145 : vector<8x32xf32>
    %147 = math.sqrt %144 : vector<8x1xf32>
    %cst_59 = arith.constant 9.99999997E-7 : f32
    %148 = vector.broadcast %cst_59 : f32 to vector<8x1xf32>
    %149 = arith.addf %147, %148 : vector<8x1xf32>
    %150 = vector.broadcast %149 : vector<8x1xf32> to vector<8x32xf32>
    %151 = arith.divf %146, %150 : vector<8x32xf32>
    %cst_60 = arith.constant dense<0.000000e+00> : vector<32xf32>
    %152 = vector.multi_reduction <add>, %151, %cst_60 [0] : vector<8x32xf32> to vector<32xf32>
    %153 = vector.shape_cast %152 : vector<32xf32> to vector<1x32xf32>
    %cst_61 = arith.constant 8.000000e+00 : f32
    %154 = vector.broadcast %cst_61 : f32 to vector<1x32xf32>
    %155 = arith.divf %153, %154 : vector<1x32xf32>
    %156 = vector.broadcast %155 : vector<1x32xf32> to vector<8x32xf32>
    %157 = arith.subf %151, %156 : vector<8x32xf32>
    %158 = arith.mulf %157, %157 : vector<8x32xf32>
    %cst_62 = arith.constant dense<0.000000e+00> : vector<32xf32>
    %159 = vector.multi_reduction <add>, %158, %cst_62 [0] : vector<8x32xf32> to vector<32xf32>
    %160 = vector.shape_cast %159 : vector<32xf32> to vector<1x32xf32>
    %cst_63 = arith.constant 0.142857149 : f32
    %161 = vector.broadcast %cst_63 : f32 to vector<1x32xf32>
    %162 = arith.mulf %160, %161 : vector<1x32xf32>
    %163 = vector.broadcast %155 : vector<1x32xf32> to vector<8x32xf32>
    %164 = arith.subf %151, %163 : vector<8x32xf32>
    %165 = math.sqrt %162 : vector<1x32xf32>
    %cst_64 = arith.constant 9.99999997E-7 : f32
    %166 = vector.broadcast %cst_64 : f32 to vector<1x32xf32>
    %167 = arith.addf %165, %166 : vector<1x32xf32>
    %168 = vector.broadcast %167 : vector<1x32xf32> to vector<8x32xf32>
    %169 = arith.divf %164, %168 : vector<8x32xf32>
    %c0_65 = arith.constant 0 : index
    %c0_66 = arith.constant 0 : index
    %170 = vector.load %arg7[%c0_65, %c0_66] : memref<32x32xf32, #tpu.memory_space<vmem>>, vector<32x32xf32>
    %cst_67 = arith.constant dense<0.000000e+00> : vector<8x32xf32>
    %171 = tpu.matmul %169, %170, %cst_67 {dimension_numbers = #tpu.dot_dimension_numbers<[1], [0], [0], [1], [0, 0, 1, 1], [], []>} : vector<8x32xf32>, vector<32x32xf32>, vector<8x32xf32> -> vector<8x32xf32>
    %c0_68 = arith.constant 0 : index
    %c0_69 = arith.constant 0 : index
    %172 = vector.load %arg8[%c0_68, %c0_69] : memref<1x32xf32, #tpu.memory_space<vmem>>, vector<1x32xf32>
    %173 = vector.broadcast %172 : vector<1x32xf32> to vector<8x32xf32>
    %174 = arith.addf %171, %173 : vector<8x32xf32>
    %cst_70 = arith.constant dense<0.000000e+00> : vector<8xf32>
    %175 = vector.multi_reduction <add>, %174, %cst_70 [1] : vector<8x32xf32> to vector<8xf32>
    %176 = vector.shape_cast %175 : vector<8xf32> to vector<8x1xf32>
    %cst_71 = arith.constant 3.200000e+01 : f32
    %177 = vector.broadcast %cst_71 : f32 to vector<8x1xf32>
    %178 = arith.divf %176, %177 : vector<8x1xf32>
    %179 = vector.broadcast %178 : vector<8x1xf32> to vector<8x32xf32>
    %180 = arith.subf %174, %179 : vector<8x32xf32>
    %181 = arith.mulf %180, %180 : vector<8x32xf32>
    %cst_72 = arith.constant dense<0.000000e+00> : vector<8xf32>
    %182 = vector.multi_reduction <add>, %181, %cst_72 [1] : vector<8x32xf32> to vector<8xf32>
    %183 = vector.shape_cast %182 : vector<8xf32> to vector<8x1xf32>
    %cst_73 = arith.constant 0.0322580636 : f32
    %184 = vector.broadcast %cst_73 : f32 to vector<8x1xf32>
    %185 = arith.mulf %183, %184 : vector<8x1xf32>
    %186 = vector.broadcast %178 : vector<8x1xf32> to vector<8x32xf32>
    %187 = arith.subf %174, %186 : vector<8x32xf32>
    %188 = math.sqrt %185 : vector<8x1xf32>
    %cst_74 = arith.constant 9.99999997E-7 : f32
    %189 = vector.broadcast %cst_74 : f32 to vector<8x1xf32>
    %190 = arith.addf %188, %189 : vector<8x1xf32>
    %191 = vector.broadcast %190 : vector<8x1xf32> to vector<8x32xf32>
    %192 = arith.divf %187, %191 : vector<8x32xf32>
    %cst_75 = arith.constant dense<0.000000e+00> : vector<32xf32>
    %193 = vector.multi_reduction <add>, %192, %cst_75 [0] : vector<8x32xf32> to vector<32xf32>
    %194 = vector.shape_cast %193 : vector<32xf32> to vector<1x32xf32>
    %cst_76 = arith.constant 8.000000e+00 : f32
    %195 = vector.broadcast %cst_76 : f32 to vector<1x32xf32>
    %196 = arith.divf %194, %195 : vector<1x32xf32>
    %197 = vector.broadcast %196 : vector<1x32xf32> to vector<8x32xf32>
    %198 = arith.subf %192, %197 : vector<8x32xf32>
    %199 = arith.mulf %198, %198 : vector<8x32xf32>
    %cst_77 = arith.constant dense<0.000000e+00> : vector<32xf32>
    %200 = vector.multi_reduction <add>, %199, %cst_77 [0] : vector<8x32xf32> to vector<32xf32>
    %201 = vector.shape_cast %200 : vector<32xf32> to vector<1x32xf32>
    %cst_78 = arith.constant 0.142857149 : f32
    %202 = vector.broadcast %cst_78 : f32 to vector<1x32xf32>
    %203 = arith.mulf %201, %202 : vector<1x32xf32>
    %204 = vector.broadcast %196 : vector<1x32xf32> to vector<8x32xf32>
    %205 = arith.subf %192, %204 : vector<8x32xf32>
    %206 = math.sqrt %203 : vector<1x32xf32>
    %cst_79 = arith.constant 9.99999997E-7 : f32
    %207 = vector.broadcast %cst_79 : f32 to vector<1x32xf32>
    %208 = arith.addf %206, %207 : vector<1x32xf32>
    %209 = vector.broadcast %208 : vector<1x32xf32> to vector<8x32xf32>
    %210 = arith.divf %205, %209 : vector<8x32xf32>
    %c0_80 = arith.constant 0 : index
    %c0_81 = arith.constant 0 : index
    %211 = vector.load %arg9[%c0_80, %c0_81] : memref<32x32xf32, #tpu.memory_space<vmem>>, vector<32x32xf32>
    %cst_82 = arith.constant dense<0.000000e+00> : vector<8x32xf32>
    %212 = tpu.matmul %210, %211, %cst_82 {dimension_numbers = #tpu.dot_dimension_numbers<[1], [0], [0], [1], [0, 0, 1, 1], [], []>} : vector<8x32xf32>, vector<32x32xf32>, vector<8x32xf32> -> vector<8x32xf32>
    %c0_83 = arith.constant 0 : index
    %c0_84 = arith.constant 0 : index
    %213 = vector.load %arg11[%c0_83, %c0_84] : memref<1x32xf32, #tpu.memory_space<vmem>>, vector<1x32xf32>
    %214 = vector.broadcast %213 : vector<1x32xf32> to vector<8x32xf32>
    %215 = arith.addf %212, %214 : vector<8x32xf32>
    %c0_85 = arith.constant 0 : index
    %c0_86 = arith.constant 0 : index
    %216 = vector.load %arg10[%c0_85, %c0_86] : memref<32x32xf32, #tpu.memory_space<vmem>>, vector<32x32xf32>
    %cst_87 = arith.constant dense<0.000000e+00> : vector<8x32xf32>
    %217 = tpu.matmul %5, %216, %cst_87 {dimension_numbers = #tpu.dot_dimension_numbers<[1], [0], [0], [1], [0, 0, 1, 1], [], []>} : vector<8x32xf32>, vector<32x32xf32>, vector<8x32xf32> -> vector<8x32xf32>
    %c0_88 = arith.constant 0 : index
    %c0_89 = arith.constant 0 : index
    %218 = vector.load %arg13[%c0_88, %c0_89] : memref<1x32xf32, #tpu.memory_space<vmem>>, vector<1x32xf32>
    %219 = vector.broadcast %218 : vector<1x32xf32> to vector<8x32xf32>
    %220 = arith.addf %217, %219 : vector<8x32xf32>
    %221 = tpu.transpose %14, [1, 0] : vector<8x32xf32> -> vector<32x8xf32>
    %222 = vector.extract_strided_slice %215 {offsets = [0, 0], sizes = [8, 8], strides = [1, 1]} : vector<8x32xf32> to vector<8x8xf32>
    %223 = vector.extract_strided_slice %221 {offsets = [0, 0], sizes = [8, 8], strides = [1, 1]} : vector<32x8xf32> to vector<8x8xf32>
    %cst_90 = arith.constant dense<0.000000e+00> : vector<8x8xf32>
    %224 = tpu.matmul %222, %223, %cst_90 {dimension_numbers = #tpu.dot_dimension_numbers<[1], [0], [0], [1], [0, 0, 1, 1], [], []>} : vector<8x8xf32>, vector<8x8xf32>, vector<8x8xf32> -> vector<8x8xf32>
    %cst_91 = arith.constant dense<0xFF800000> : vector<8xf32>
    %225 = vector.multi_reduction <maximumf>, %224, %cst_91 [1] : vector<8x8xf32> to vector<8xf32>
    %226 = vector.shape_cast %225 : vector<8xf32> to vector<8x1xf32>
    %227 = vector.broadcast %226 : vector<8x1xf32> to vector<8x8xf32>
    %228 = arith.subf %224, %227 : vector<8x8xf32>
    %229 = math.exp %228 : vector<8x8xf32>
    %cst_92 = arith.constant dense<0.000000e+00> : vector<8xf32>
    %230 = vector.multi_reduction <add>, %229, %cst_92 [1] : vector<8x8xf32> to vector<8xf32>
    %231 = vector.shape_cast %230 : vector<8xf32> to vector<8x1xf32>
    %232 = tpu.reciprocal %231 {approx = true} : vector<8x1xf32> -> vector<8x1xf32>
    %233 = vector.broadcast %232 : vector<8x1xf32> to vector<8x8xf32>
    %234 = arith.mulf %229, %233 : vector<8x8xf32>
    %235 = vector.extract_strided_slice %220 {offsets = [0, 0], sizes = [8, 8], strides = [1, 1]} : vector<8x32xf32> to vector<8x8xf32>
    %cst_93 = arith.constant dense<0.000000e+00> : vector<8x8xf32>
    %236 = tpu.matmul %234, %235, %cst_93 {dimension_numbers = #tpu.dot_dimension_numbers<[1], [0], [0], [1], [0, 0, 1, 1], [], []>} : vector<8x8xf32>, vector<8x8xf32>, vector<8x8xf32> -> vector<8x8xf32>
    %c0_94 = arith.constant 0 : index
    %c0_95 = arith.constant 0 : index
    %237 = vector.load %arg17[%c0_94, %c0_95] : memref<8x32xf32, #tpu.memory_space<vmem>>, vector<8x8xf32>
    tpu.vector_store %arg17[%c0_94, %c0_95], %236 {strides = array<i32>} : memref<8x32xf32, #tpu.memory_space<vmem>>, vector<8x8xf32>,
    %238 = vector.extract_strided_slice %215 {offsets = [0, 8], sizes = [8, 8], strides = [1, 1]} : vector<8x32xf32> to vector<8x8xf32>
    %239 = vector.extract_strided_slice %221 {offsets = [8, 0], sizes = [8, 8], strides = [1, 1]} : vector<32x8xf32> to vector<8x8xf32>
    %cst_96 = arith.constant dense<0.000000e+00> : vector<8x8xf32>
    %240 = tpu.matmul %238, %239, %cst_96 {dimension_numbers = #tpu.dot_dimension_numbers<[1], [0], [0], [1], [0, 0, 1, 1], [], []>} : vector<8x8xf32>, vector<8x8xf32>, vector<8x8xf32> -> vector<8x8xf32>
    %cst_97 = arith.constant dense<0xFF800000> : vector<8xf32>
    %241 = vector.multi_reduction <maximumf>, %240, %cst_97 [1] : vector<8x8xf32> to vector<8xf32>
    %242 = vector.shape_cast %241 : vector<8xf32> to vector<8x1xf32>
    %243 = vector.broadcast %242 : vector<8x1xf32> to vector<8x8xf32>
    %244 = arith.subf %240, %243 : vector<8x8xf32>
    %245 = math.exp %244 : vector<8x8xf32>
    %cst_98 = arith.constant dense<0.000000e+00> : vector<8xf32>
    %246 = vector.multi_reduction <add>, %245, %cst_98 [1] : vector<8x8xf32> to vector<8xf32>
    %247 = vector.shape_cast %246 : vector<8xf32> to vector<8x1xf32>
    %248 = tpu.reciprocal %247 {approx = true} : vector<8x1xf32> -> vector<8x1xf32>
    %249 = vector.broadcast %248 : vector<8x1xf32> to vector<8x8xf32>
    %250 = arith.mulf %245, %249 : vector<8x8xf32>
    %251 = vector.extract_strided_slice %220 {offsets = [0, 8], sizes = [8, 8], strides = [1, 1]} : vector<8x32xf32> to vector<8x8xf32>
    %cst_99 = arith.constant dense<0.000000e+00> : vector<8x8xf32>
    %252 = tpu.matmul %250, %251, %cst_99 {dimension_numbers = #tpu.dot_dimension_numbers<[1], [0], [0], [1], [0, 0, 1, 1], [], []>} : vector<8x8xf32>, vector<8x8xf32>, vector<8x8xf32> -> vector<8x8xf32>
    %c0_100 = arith.constant 0 : index
    %c8_101 = arith.constant 8 : index
    %253 = vector.load %arg17[%c0_100, %c8_101] : memref<8x32xf32, #tpu.memory_space<vmem>>, vector<8x8xf32>
    tpu.vector_store %arg17[%c0_100, %c8_101], %252 {strides = array<i32>} : memref<8x32xf32, #tpu.memory_space<vmem>>, vector<8x8xf32>,
    %254 = vector.extract_strided_slice %215 {offsets = [0, 16], sizes = [8, 8], strides = [1, 1]} : vector<8x32xf32> to vector<8x8xf32>
    %255 = vector.extract_strided_slice %221 {offsets = [16, 0], sizes = [8, 8], strides = [1, 1]} : vector<32x8xf32> to vector<8x8xf32>
    %cst_102 = arith.constant dense<0.000000e+00> : vector<8x8xf32>
    %256 = tpu.matmul %254, %255, %cst_102 {dimension_numbers = #tpu.dot_dimension_numbers<[1], [0], [0], [1], [0, 0, 1, 1], [], []>} : vector<8x8xf32>, vector<8x8xf32>, vector<8x8xf32> -> vector<8x8xf32>
    %cst_103 = arith.constant dense<0xFF800000> : vector<8xf32>
    %257 = vector.multi_reduction <maximumf>, %256, %cst_103 [1] : vector<8x8xf32> to vector<8xf32>
    %258 = vector.shape_cast %257 : vector<8xf32> to vector<8x1xf32>
    %259 = vector.broadcast %258 : vector<8x1xf32> to vector<8x8xf32>
    %260 = arith.subf %256, %259 : vector<8x8xf32>
    %261 = math.exp %260 : vector<8x8xf32>
    %cst_104 = arith.constant dense<0.000000e+00> : vector<8xf32>
    %262 = vector.multi_reduction <add>, %261, %cst_104 [1] : vector<8x8xf32> to vector<8xf32>
    %263 = vector.shape_cast %262 : vector<8xf32> to vector<8x1xf32>
    %264 = tpu.reciprocal %263 {approx = true} : vector<8x1xf32> -> vector<8x1xf32>
    %265 = vector.broadcast %264 : vector<8x1xf32> to vector<8x8xf32>
    %266 = arith.mulf %261, %265 : vector<8x8xf32>
    %267 = vector.extract_strided_slice %220 {offsets = [0, 16], sizes = [8, 8], strides = [1, 1]} : vector<8x32xf32> to vector<8x8xf32>
    %cst_105 = arith.constant dense<0.000000e+00> : vector<8x8xf32>
    %268 = tpu.matmul %266, %267, %cst_105 {dimension_numbers = #tpu.dot_dimension_numbers<[1], [0], [0], [1], [0, 0, 1, 1], [], []>} : vector<8x8xf32>, vector<8x8xf32>, vector<8x8xf32> -> vector<8x8xf32>
    %c0_106 = arith.constant 0 : index
    %c16_107 = arith.constant 16 : index
    %269 = vector.load %arg17[%c0_106, %c16_107] : memref<8x32xf32, #tpu.memory_space<vmem>>, vector<8x8xf32>
    tpu.vector_store %arg17[%c0_106, %c16_107], %268 {strides = array<i32>} : memref<8x32xf32, #tpu.memory_space<vmem>>, vector<8x8xf32>,
    %270 = vector.extract_strided_slice %215 {offsets = [0, 24], sizes = [8, 8], strides = [1, 1]} : vector<8x32xf32> to vector<8x8xf32>
    %271 = vector.extract_strided_slice %221 {offsets = [24, 0], sizes = [8, 8], strides = [1, 1]} : vector<32x8xf32> to vector<8x8xf32>
    %cst_108 = arith.constant dense<0.000000e+00> : vector<8x8xf32>
    %272 = tpu.matmul %270, %271, %cst_108 {dimension_numbers = #tpu.dot_dimension_numbers<[1], [0], [0], [1], [0, 0, 1, 1], [], []>} : vector<8x8xf32>, vector<8x8xf32>, vector<8x8xf32> -> vector<8x8xf32>
    %cst_109 = arith.constant dense<0xFF800000> : vector<8xf32>
    %273 = vector.multi_reduction <maximumf>, %272, %cst_109 [1] : vector<8x8xf32> to vector<8xf32>
    %274 = vector.shape_cast %273 : vector<8xf32> to vector<8x1xf32>
    %275 = vector.broadcast %274 : vector<8x1xf32> to vector<8x8xf32>
    %276 = arith.subf %272, %275 : vector<8x8xf32>
    %277 = math.exp %276 : vector<8x8xf32>
    %cst_110 = arith.constant dense<0.000000e+00> : vector<8xf32>
    %278 = vector.multi_reduction <add>, %277, %cst_110 [1] : vector<8x8xf32> to vector<8xf32>
    %279 = vector.shape_cast %278 : vector<8xf32> to vector<8x1xf32>
    %280 = tpu.reciprocal %279 {approx = true} : vector<8x1xf32> -> vector<8x1xf32>
    %281 = vector.broadcast %280 : vector<8x1xf32> to vector<8x8xf32>
    %282 = arith.mulf %277, %281 : vector<8x8xf32>
    %283 = vector.extract_strided_slice %220 {offsets = [0, 24], sizes = [8, 8], strides = [1, 1]} : vector<8x32xf32> to vector<8x8xf32>
    %cst_111 = arith.constant dense<0.000000e+00> : vector<8x8xf32>
    %284 = tpu.matmul %282, %283, %cst_111 {dimension_numbers = #tpu.dot_dimension_numbers<[1], [0], [0], [1], [0, 0, 1, 1], [], []>} : vector<8x8xf32>, vector<8x8xf32>, vector<8x8xf32> -> vector<8x8xf32>
    %c0_112 = arith.constant 0 : index
    %c24_113 = arith.constant 24 : index
    %285 = vector.load %arg17[%c0_112, %c24_113] : memref<8x32xf32, #tpu.memory_space<vmem>>, vector<8x8xf32>
    tpu.vector_store %arg17[%c0_112, %c24_113], %284 {strides = array<i32>} : memref<8x32xf32, #tpu.memory_space<vmem>>, vector<8x8xf32>,
    %c0_114 = arith.constant 0 : index
    %c0_115 = arith.constant 0 : index
    %286 = vector.load %arg17[%c0_114, %c0_115] : memref<8x32xf32, #tpu.memory_space<vmem>>, vector<8x32xf32>
    %c0_116 = arith.constant 0 : index
    %c0_117 = arith.constant 0 : index
    %287 = vector.load %arg14[%c0_116, %c0_117] : memref<32x32xf32, #tpu.memory_space<vmem>>, vector<32x32xf32>
    %cst_118 = arith.constant dense<0.000000e+00> : vector<8x32xf32>
    %288 = tpu.matmul %286, %287, %cst_118 {dimension_numbers = #tpu.dot_dimension_numbers<[1], [0], [0], [1], [0, 0, 1, 1], [], []>} : vector<8x32xf32>, vector<32x32xf32>, vector<8x32xf32> -> vector<8x32xf32>
    %c0_119 = arith.constant 0 : index
    %c0_120 = arith.constant 0 : index
    %289 = vector.load %arg15[%c0_119, %c0_120] : memref<1x32xf32, #tpu.memory_space<vmem>>, vector<1x32xf32>
    %290 = vector.broadcast %289 : vector<1x32xf32> to vector<8x32xf32>
    %291 = arith.addf %288, %290 : vector<8x32xf32>
    %c0_121 = arith.constant 0 : index
    %c0_122 = arith.constant 0 : index
    %c0_123 = arith.constant 0 : index
    %292 = vector.load %arg16[%c0_121, %c0_122, %c0_123] : memref<1x8x32xf32, #tpu.memory_space<vmem>>, vector<1x8x32xf32>
    %293 = vector.shape_cast %292 : vector<1x8x32xf32> to vector<8x32xf32>
    %294 = vector.shape_cast %291 : vector<8x32xf32> to vector<1x8x32xf32>
    tpu.vector_store %arg16[%c0_121, %c0_122, %c0_123], %294 {strides = array<i32>} : memref<1x8x32xf32, #tpu.memory_space<vmem>>, vector<1x8x32xf32>,
    return
  }
  func.func @transform_0(%arg0: i32) -> (i32, i32, i32) {
    %c0_i32 = arith.constant 0 : i32
    %c0_i32_0 = arith.constant 0 : i32
    %c0_i32_1 = arith.constant 0 : i32
    return %arg0, %c0_i32, %c0_i32_0 : i32, i32, i32
  }
  func.func @transform_1(%arg0: i32) -> (i32, i32, i32) {
    %c0_i32 = arith.constant 0 : i32
    %c0_i32_0 = arith.constant 0 : i32
    %c0_i32_1 = arith.constant 0 : i32
    return %arg0, %c0_i32, %c0_i32_0 : i32, i32, i32
  }
  func.func @transform_2(%arg0: i32) -> (i32, i32, i32) {
    %c0_i32 = arith.constant 0 : i32
    %c0_i32_0 = arith.constant 0 : i32
    %c0_i32_1 = arith.constant 0 : i32
    return %arg0, %c0_i32, %c0_i32_0 : i32, i32, i32
  }
  func.func @transform_3(%arg0: i32) -> (i32, i32, i32) {
    %c0_i32 = arith.constant 0 : i32
    %c0_i32_0 = arith.constant 0 : i32
    %c0_i32_1 = arith.constant 0 : i32
    return %arg0, %c0_i32, %c0_i32_0 : i32, i32, i32
  }
  func.func @transform_4(%arg0: i32) -> (i32, i32) {
    %c0_i32 = arith.constant 0 : i32
    %c0_i32_0 = arith.constant 0 : i32
    %c0_i32_1 = arith.constant 0 : i32
    return %c0_i32, %c0_i32_0 : i32, i32
  }
  func.func @transform_5(%arg0: i32) -> (i32, i32) {
    %c0_i32 = arith.constant 0 : i32
    %c0_i32_0 = arith.constant 0 : i32
    %c0_i32_1 = arith.constant 0 : i32
    return %c0_i32, %c0_i32_0 : i32, i32
  }
  func.func @transform_6(%arg0: i32) -> (i32, i32) {
    %c0_i32 = arith.constant 0 : i32
    %c0_i32_0 = arith.constant 0 : i32
    %c0_i32_1 = arith.constant 0 : i32
    return %c0_i32, %c0_i32_0 : i32, i32
  }
  func.func @transform_7(%arg0: i32) -> (i32, i32) {
    %c0_i32 = arith.constant 0 : i32
    %c0_i32_0 = arith.constant 0 : i32
    %c0_i32_1 = arith.constant 0 : i32
    return %c0_i32, %c0_i32_0 : i32, i32
  }
  func.func @transform_8(%arg0: i32) -> (i32, i32) {
    %c0_i32 = arith.constant 0 : i32
    %c0_i32_0 = arith.constant 0 : i32
    %c0_i32_1 = arith.constant 0 : i32
    return %c0_i32, %c0_i32_0 : i32, i32
  }
  func.func @transform_9(%arg0: i32) -> (i32, i32) {
    %c0_i32 = arith.constant 0 : i32
    %c0_i32_0 = arith.constant 0 : i32
    %c0_i32_1 = arith.constant 0 : i32
    return %c0_i32, %c0_i32_0 : i32, i32
  }
  func.func @transform_10(%arg0: i32) -> (i32, i32) {
    %c0_i32 = arith.constant 0 : i32
    %c0_i32_0 = arith.constant 0 : i32
    %c0_i32_1 = arith.constant 0 : i32
    return %c0_i32, %c0_i32_0 : i32, i32
  }
  func.func @transform_11(%arg0: i32) -> (i32, i32) {
    %c0_i32 = arith.constant 0 : i32
    %c0_i32_0 = arith.constant 0 : i32
    %c0_i32_1 = arith.constant 0 : i32
    return %c0_i32, %c0_i32_0 : i32, i32
  }
  func.func @transform_12(%arg0: i32) -> (i32, i32) {
    %c0_i32 = arith.constant 0 : i32
    %c0_i32_0 = arith.constant 0 : i32
    %c0_i32_1 = arith.constant 0 : i32
    return %c0_i32, %c0_i32_0 : i32, i32
  }
  func.func @transform_13(%arg0: i32) -> (i32, i32) {
    %c0_i32 = arith.constant 0 : i32
    %c0_i32_0 = arith.constant 0 : i32
    %c0_i32_1 = arith.constant 0 : i32
    return %c0_i32, %c0_i32_0 : i32, i32
  }
  func.func @transform_14(%arg0: i32) -> (i32, i32) {
    %c0_i32 = arith.constant 0 : i32
    %c0_i32_0 = arith.constant 0 : i32
    %c0_i32_1 = arith.constant 0 : i32
    return %c0_i32, %c0_i32_0 : i32, i32
  }
  func.func @transform_15(%arg0: i32) -> (i32, i32, i32) {
    %c0_i32 = arith.constant 0 : i32
    %c0_i32_0 = arith.constant 0 : i32
    %c0_i32_1 = arith.constant 0 : i32
    return %arg0, %c0_i32, %c0_i32_0 : i32, i32, i32
  }
}

</mosaic_0001>

<llo_original>
// kernel: graph_encoder_decoder_attention.1
$region0: #{graph_encoder_decoder_attention.1}
  #allocation0 [shape = 'u32[]', space=smem, size = 0x4, offset = 0x4, fixed_abs, tag = 'smem constant byte address 0x4 - core index']
  #allocation1 [shape = 'u32[72,128]{1,0:T(1,128)}', space=vmem, size = 0x9000, scoped, tag = 'internal scratch']
  #allocation2 [shape = 'f32[8,32]{1,0:T(8,128)}', space=vmem, size = 0x1000, scoped, tag = 'scratch operand']
  %s0 = inlined_call_operand.hbm [shape: f32[2,8,32], index: 0, kind: input, shape index: {}]
  %s1 = inlined_call_operand.hbm [shape: f32[2,8,32], index: 1, kind: input, shape index: {}]
  %s2 = inlined_call_operand.hbm [shape: f32[2,8,32], index: 2, kind: input, shape index: {}]
  %s3 = inlined_call_operand.hbm [shape: f32[2,8,8], index: 3, kind: input, shape index: {}]
  %s4 = inlined_call_operand.vmem [shape: f32[32,68], index: 4, kind: input, shape index: {}]
  %s5 = inlined_call_operand.vmem [shape: f32[32,4], index: 5, kind: input, shape index: {}]
  %s6 = inlined_call_operand.hbm [shape: f32[32,32], index: 6, kind: input, shape index: {}]
  %s7 = inlined_call_operand.vmem [shape: f32[1,32], index: 7, kind: input, shape index: {}]
  %s8 = inlined_call_operand.hbm [shape: f32[32,32], index: 8, kind: input, shape index: {}]
  %s9 = inlined_call_operand.hbm [shape: f32[32,32], index: 9, kind: input, shape index: {}]
  %s10 = inlined_call_operand.vmem [shape: f32[1,32], index: 10, kind: input, shape index: {}]
  %s11 = inlined_call_operand.vmem [shape: f32[1,32], index: 11, kind: input, shape index: {}]
  %s12 = inlined_call_operand.vmem [shape: f32[1,32], index: 12, kind: input, shape index: {}]
  %s13 = inlined_call_operand.hbm [shape: f32[32,32], index: 13, kind: input, shape index: {}]
  %s14 = inlined_call_operand.vmem [shape: f32[1,32], index: 14, kind: input, shape index: {}]
  %s15 = inlined_call_operand.hbm [shape: f32[2,8,32], index: 15, kind: output, shape index: {}]
  %s16 = sld [smem:[#allocation0]]
  $region125: #{graph_encoder_decoder_attention.1} parent=0
    _
  %s18 = ssub.s32 1, %s16
  %s19 = scalar_select 0, %s18, %s16
  $region1: #{graph_encoder_decoder_attention.1} parent=0
    #allocation3 [shape = 'u8[8192]{0}', space=vmem, size = 0x2000, scoped, tag = 'input window, operand 0']
    #allocation4 [shape = 's32[2]{0}', space=sflag, size = 0x8, scoped, tag = 'scoped memory for graph_encoder_decoder_attention.1']
    #allocation5 [shape = 's32[2]{0}', space=sflag, size = 0x8, scoped, tag = 'scoped memory for graph_encoder_decoder_attention.1']
    #allocation6 [shape = 'u8[8192]{0}', space=vmem, size = 0x2000, scoped, tag = 'input window, operand 1']
    #allocation7 [shape = 's32[2]{0}', space=sflag, size = 0x8, scoped, tag = 'scoped memory for graph_encoder_decoder_attention.1']
    #allocation8 [shape = 'u8[8192]{0}', space=vmem, size = 0x2000, scoped, tag = 'input window, operand 2']
    #allocation9 [shape = 'u8[8192]{0}', space=vmem, size = 0x2000, scoped, tag = 'input window, operand 3']
    #allocation10 [shape = 's32[2]{0}', space=sflag, size = 0x8, scoped, tag = 'scoped memory for graph_encoder_decoder_attention.1']
    #allocation11 [shape = 'u8[16384]{0}', space=vmem, size = 0x4000, scoped, tag = 'input window, operand 6, single buffered']
    #allocation12 [shape = 'u8[16384]{0}', space=vmem, size = 0x4000, scoped, tag = 'input window, operand 8, single buffered']
    #allocation13 [shape = 's32[1]{0}', space=sflag, size = 0x4, scoped, tag = 'scoped memory for graph_encoder_decoder_attention.1']
    #allocation14 [shape = 'u8[16384]{0}', space=vmem, size = 0x4000, scoped, tag = 'input window, operand 9, single buffered']
    #allocation15 [shape = 'u8[16384]{0}', space=vmem, size = 0x4000, scoped, tag = 'input window, operand 13, single buffered']
    #allocation16 [shape = 's32[1]{0}', space=sflag, size = 0x4, scoped, tag = 'scoped memory for graph_encoder_decoder_attention.1']
    #allocation17 [shape = 'u8[8192]{0}', space=vmem, size = 0x2000, scoped, tag = 'output window, operand 0']
    %20 = vsyncpa [#allocation4], 0
    %s21 = scalar_lea.sflag [#allocation4], 1
    %22 = vsyncpa %s21, 0
    %23 = vsyncpa [#allocation7], 0
    %s24 = scalar_lea.sflag [#allocation7], 1
    %25 = vsyncpa %s24, 0
    %26 = vsyncpa [#allocation10], 0
    %s27 = scalar_lea.sflag [#allocation10], 1
    %28 = vsyncpa %s27, 0
    %29 = vsyncpa [#allocation13], 0
    %30 = vsyncpa [#allocation16], 0
    %31 = vsyncpa [#allocation5], 0
    %s32 = scalar_lea.sflag [#allocation5], 1
    %33 = vsyncpa %s32, 0
    loop: start=0, step=1, limit=4
    $region2: #{graph_encoder_decoder_attention.1} parent=1 // loop_pre_header
      _
    $region3: #{graph_encoder_decoder_attention.1} parent=1 // loop_header
      %s35 = sphi 0, %s39
      %p36 = scmp.ge.s32.totalorder %s35, 4
      %s45 = sphi 0, %s47
      %s48 = sphi 0, %s45
      %s49 = sphi 0, %s48
      %s65 = sphi 0, %s49
      %s71 = sphi 0, %s73
      %s74 = sphi 0, %s71
      %s75 = sphi 0, %s74
      %s91 = sphi 0, %s75
      %s97 = sphi 0, %s99
      %s100 = sphi 0, %s97
      %s101 = sphi 0, %s100
      %s117 = sphi 0, %s101
      %s123 = sphi 0, %s125
      %s126 = sphi 0, %s123
      %s127 = sphi 0, %s126
      %s143 = sphi 0, %s127
      %s147 = sphi 0, %s147
      %s149 = sphi 0, %s147
      %s150 = sphi 0, %s149
      %s164 = sphi 0, %s150
      %s168 = sphi 0, %s168
      %s170 = sphi 0, %s168
      %s171 = sphi 0, %s170
      %s185 = sphi 0, %s171
      %s189 = sphi 0, %s189
      %s191 = sphi 0, %s189
      %s192 = sphi 0, %s191
      %s206 = sphi 0, %s192
      %s210 = sphi 0, %s210
      %s212 = sphi 0, %s210
      %s213 = sphi 0, %s212
      %s227 = sphi 0, %s213
      %s231 = sphi 0, %s231
      %s233 = sphi 0, %s231
      %s234 = sphi 0, %s233
      %s248 = sphi 0, %s234
      %s252 = sphi 0, %s252
      %s254 = sphi 0, %s252
      %s255 = sphi 0, %s254
      %s269 = sphi 0, %s255
      %s273 = sphi 0, %s273
      %s275 = sphi 0, %s273
      %s276 = sphi 0, %s275
      %s290 = sphi 0, %s276
      %s294 = sphi 0, %s294
      %s296 = sphi 0, %s294
      %s297 = sphi 0, %s296
      %s311 = sphi 0, %s297
      %s315 = sphi 0, %s315
      %s317 = sphi 0, %s315
      %s318 = sphi 0, %s317
      %s332 = sphi 0, %s318
      %s336 = sphi 0, %s336
      %s338 = sphi 0, %s336
      %s339 = sphi 0, %s338
      %s353 = sphi 0, %s339
      %s357 = sphi 0, %s357
      %s359 = sphi 0, %s357
      %s360 = sphi 0, %s359
      %s374 = sphi 0, %s360
      %s380 = sphi 0, %s382
      %s383 = sphi 0, %s380
      %s384 = sphi 0, %s383
      %s400 = sphi 0, %s384
    $region4: #{graph_encoder_decoder_attention.1} parent=1 // loop_header_branch
      %38 = sbr.rel (%p36) target = $region8
    $region5: #{graph_encoder_decoder_attention.1} parent=1 // loop_body
      %s40 = ssub.s32 %s35, 1
      %s41 = ssub.s32 %s35, 2
      %s42 = sadd.s32 %s35, 1
      %s43 = ssub.s32 %s35, %s42
      %p44 = scmp.eq.s32.totalorder %s43, 0
      %s46 = sadd.s32 %s45, 1
      %s47 = scalar_select %p44, %s45, %s46
      %p50 = pneg %p44
      %p51 = scmp.eq.s32.totalorder %s35, 1
      %p52 = por %p50, %p51
      %p53 = scmp.ne.s32.totalorder %s45, %s48
      %p54 = scmp.eq.s32.totalorder %s35, 0
      %p55 = por %p53, %p54
      %p56 = scmp.ne.s32.totalorder %s45, %s48
      %p57 = scmp.eq.s32.totalorder %s40, 1
      %p58 = por %p56, %p57
      %p59 = scmp.ne.s32.totalorder %s48, %s49
      %p60 = scmp.eq.s32.totalorder %s40, 0
      %p61 = por %p59, %p60
      %p62 = scmp.ne.s32.totalorder %s48, %s49
      %p63 = scmp.eq.s32.totalorder %s41, 1
      %p64 = por %p62, %p63
      %p66 = scmp.ne.s32.totalorder %s49, %s65
      %p67 = scmp.eq.s32.totalorder %s41, 0
      %p68 = por %p66, %p67
      %s69 = ssub.s32 %s35, %s42
      %p70 = scmp.eq.s32.totalorder %s69, 0
      %s72 = sadd.s32 %s71, 1
      %s73 = scalar_select %p70, %s71, %s72
      %p76 = pneg %p70
      %p77 = scmp.eq.s32.totalorder %s35, 1
      %p78 = por %p76, %p77
      %p79 = scmp.ne.s32.totalorder %s71, %s74
      %p80 = scmp.eq.s32.totalorder %s35, 0
      %p81 = por %p79, %p80
      %p82 = scmp.ne.s32.totalorder %s71, %s74
      %p83 = scmp.eq.s32.totalorder %s40, 1
      %p84 = por %p82, %p83
      %p85 = scmp.ne.s32.totalorder %s74, %s75
      %p86 = scmp.eq.s32.totalorder %s40, 0
      %p87 = por %p85, %p86
      %p88 = scmp.ne.s32.totalorder %s74, %s75
      %p89 = scmp.eq.s32.totalorder %s41, 1
      %p90 = por %p88, %p89
      %p92 = scmp.ne.s32.totalorder %s75, %s91
      %p93 = scmp.eq.s32.totalorder %s41, 0
      %p94 = por %p92, %p93
      %s95 = ssub.s32 %s35, %s42
      %p96 = scmp.eq.s32.totalorder %s95, 0
      %s98 = sadd.s32 %s97, 1
      %s99 = scalar_select %p96, %s97, %s98
      %p102 = pneg %p96
      %p103 = scmp.eq.s32.totalorder %s35, 1
      %p104 = por %p102, %p103
      %p105 = scmp.ne.s32.totalorder %s97, %s100
      %p106 = scmp.eq.s32.totalorder %s35, 0
      %p107 = por %p105, %p106
      %p108 = scmp.ne.s32.totalorder %s97, %s100
      %p109 = scmp.eq.s32.totalorder %s40, 1
      %p110 = por %p108, %p109
      %p111 = scmp.ne.s32.totalorder %s100, %s101
      %p112 = scmp.eq.s32.totalorder %s40, 0
      %p113 = por %p111, %p112
      %p114 = scmp.ne.s32.totalorder %s100, %s101
      %p115 = scmp.eq.s32.totalorder %s41, 1
      %p116 = por %p114, %p115
      %p118 = scmp.ne.s32.totalorder %s101, %s117
      %p119 = scmp.eq.s32.totalorder %s41, 0
      %p120 = por %p118, %p119
      %s121 = ssub.s32 %s35, %s42
      %p122 = scmp.eq.s32.totalorder %s121, 0
      %s124 = sadd.s32 %s123, 1
      %s125 = scalar_select %p122, %s123, %s124
      %p128 = pneg %p122
      %p129 = scmp.eq.s32.totalorder %s35, 1
      %p130 = por %p128, %p129
      %p131 = scmp.ne.s32.totalorder %s123, %s126
      %p132 = scmp.eq.s32.totalorder %s35, 0
      %p133 = por %p131, %p132
      %p134 = scmp.ne.s32.totalorder %s123, %s126
      %p135 = scmp.eq.s32.totalorder %s40, 1
      %p136 = por %p134, %p135
      %p137 = scmp.ne.s32.totalorder %s126, %s127
      %p138 = scmp.eq.s32.totalorder %s40, 0
      %p139 = por %p137, %p138
      %p140 = scmp.ne.s32.totalorder %s126, %s127
      %p141 = scmp.eq.s32.totalorder %s41, 1
      %p142 = por %p140, %p141
      %p144 = scmp.ne.s32.totalorder %s127, %s143
      %p145 = scmp.eq.s32.totalorder %s41, 0
      %p146 = por %p144, %p145
      %s148 = sadd.s32 %s147, 1
      %p151 = scmp.eq.s32.totalorder %s35, 1
      %p152 = scmp.ne.s32.totalorder %s147, %s149
      %p153 = scmp.eq.s32.totalorder %s35, 0
      %p154 = por %p152, %p153
      %p155 = scmp.ne.s32.totalorder %s147, %s149
      %p156 = scmp.eq.s32.totalorder %s40, 1
      %p157 = por %p155, %p156
      %p158 = scmp.ne.s32.totalorder %s149, %s150
      %p159 = scmp.eq.s32.totalorder %s40, 0
      %p160 = por %p158, %p159
      %p161 = scmp.ne.s32.totalorder %s149, %s150
      %p162 = scmp.eq.s32.totalorder %s41, 1
      %p163 = por %p161, %p162
      %p165 = scmp.ne.s32.totalorder %s150, %s164
      %p166 = scmp.eq.s32.totalorder %s41, 0
      %p167 = por %p165, %p166
      %s169 = sadd.s32 %s168, 1
      %p172 = scmp.eq.s32.totalorder %s35, 1
      %p173 = scmp.ne.s32.totalorder %s168, %s170
      %p174 = scmp.eq.s32.totalorder %s35, 0
      %p175 = por %p173, %p174
      %p176 = scmp.ne.s32.totalorder %s168, %s170
      %p177 = scmp.eq.s32.totalorder %s40, 1
      %p178 = por %p176, %p177
      %p179 = scmp.ne.s32.totalorder %s170, %s171
      %p180 = scmp.eq.s32.totalorder %s40, 0
      %p181 = por %p179, %p180
      %p182 = scmp.ne.s32.totalorder %s170, %s171
      %p183 = scmp.eq.s32.totalorder %s41, 1
      %p184 = por %p182, %p183
      %p186 = scmp.ne.s32.totalorder %s171, %s185
      %p187 = scmp.eq.s32.totalorder %s41, 0
      %p188 = por %p186, %p187
      %s190 = sadd.s32 %s189, 1
      %p193 = scmp.eq.s32.totalorder %s35, 1
      %p194 = scmp.ne.s32.totalorder %s189, %s191
      %p195 = scmp.eq.s32.totalorder %s35, 0
      %p196 = por %p194, %p195
      %p197 = scmp.ne.s32.totalorder %s189, %s191
      %p198 = scmp.eq.s32.totalorder %s40, 1
      %p199 = por %p197, %p198
      %p200 = scmp.ne.s32.totalorder %s191, %s192
      %p201 = scmp.eq.s32.totalorder %s40, 0
      %p202 = por %p200, %p201
      %p203 = scmp.ne.s32.totalorder %s191, %s192
      %p204 = scmp.eq.s32.totalorder %s41, 1
      %p205 = por %p203, %p204
      %p207 = scmp.ne.s32.totalorder %s192, %s206
      %p208 = scmp.eq.s32.totalorder %s41, 0
      %p209 = por %p207, %p208
      %s211 = sadd.s32 %s210, 1
      %p214 = scmp.eq.s32.totalorder %s35, 1
      %p215 = scmp.ne.s32.totalorder %s210, %s212
      %p216 = scmp.eq.s32.totalorder %s35, 0
      %p217 = por %p215, %p216
      %p218 = scmp.ne.s32.totalorder %s210, %s212
      %p219 = scmp.eq.s32.totalorder %s40, 1
      %p220 = por %p218, %p219
      %p221 = scmp.ne.s32.totalorder %s212, %s213
      %p222 = scmp.eq.s32.totalorder %s40, 0
      %p223 = por %p221, %p222
      %p224 = scmp.ne.s32.totalorder %s212, %s213
      %p225 = scmp.eq.s32.totalorder %s41, 1
      %p226 = por %p224, %p225
      %p228 = scmp.ne.s32.totalorder %s213, %s227
      %p229 = scmp.eq.s32.totalorder %s41, 0
      %p230 = por %p228, %p229
      %s232 = sadd.s32 %s231, 1
      %p235 = scmp.eq.s32.totalorder %s35, 1
      %p236 = scmp.ne.s32.totalorder %s231, %s233
      %p237 = scmp.eq.s32.totalorder %s35, 0
      %p238 = por %p236, %p237
      %p239 = scmp.ne.s32.totalorder %s231, %s233
      %p240 = scmp.eq.s32.totalorder %s40, 1
      %p241 = por %p239, %p240
      %p242 = scmp.ne.s32.totalorder %s233, %s234
      %p243 = scmp.eq.s32.totalorder %s40, 0
      %p244 = por %p242, %p243
      %p245 = scmp.ne.s32.totalorder %s233, %s234
      %p246 = scmp.eq.s32.totalorder %s41, 1
      %p247 = por %p245, %p246
      %p249 = scmp.ne.s32.totalorder %s234, %s248
      %p250 = scmp.eq.s32.totalorder %s41, 0
      %p251 = por %p249, %p250
      %s253 = sadd.s32 %s252, 1
      %p256 = scmp.eq.s32.totalorder %s35, 1
      %p257 = scmp.ne.s32.totalorder %s252, %s254
      %p258 = scmp.eq.s32.totalorder %s35, 0
      %p259 = por %p257, %p258
      %p260 = scmp.ne.s32.totalorder %s252, %s254
      %p261 = scmp.eq.s32.totalorder %s40, 1
      %p262 = por %p260, %p261
      %p263 = scmp.ne.s32.totalorder %s254, %s255
      %p264 = scmp.eq.s32.totalorder %s40, 0
      %p265 = por %p263, %p264
      %p266 = scmp.ne.s32.totalorder %s254, %s255
      %p267 = scmp.eq.s32.totalorder %s41, 1
      %p268 = por %p266, %p267
      %p270 = scmp.ne.s32.totalorder %s255, %s269
      %p271 = scmp.eq.s32.totalorder %s41, 0
      %p272 = por %p270, %p271
      %s274 = sadd.s32 %s273, 1
      %p277 = scmp.eq.s32.totalorder %s35, 1
      %p278 = scmp.ne.s32.totalorder %s273, %s275
      %p279 = scmp.eq.s32.totalorder %s35, 0
      %p280 = por %p278, %p279
      %p281 = scmp.ne.s32.totalorder %s273, %s275
      %p282 = scmp.eq.s32.totalorder %s40, 1
      %p283 = por %p281, %p282
      %p284 = scmp.ne.s32.totalorder %s275, %s276
      %p285 = scmp.eq.s32.totalorder %s40, 0
      %p286 = por %p284, %p285
      %p287 = scmp.ne.s32.totalorder %s275, %s276
      %p288 = scmp.eq.s32.totalorder %s41, 1
      %p289 = por %p287, %p288
      %p291 = scmp.ne.s32.totalorder %s276, %s290
      %p292 = scmp.eq.s32.totalorder %s41, 0
      %p293 = por %p291, %p292
      %s295 = sadd.s32 %s294, 1
      %p298 = scmp.eq.s32.totalorder %s35, 1
      %p299 = scmp.ne.s32.totalorder %s294, %s296
      %p300 = scmp.eq.s32.totalorder %s35, 0
      %p301 = por %p299, %p300
      %p302 = scmp.ne.s32.totalorder %s294, %s296
      %p303 = scmp.eq.s32.totalorder %s40, 1
      %p304 = por %p302, %p303
      %p305 = scmp.ne.s32.totalorder %s296, %s297
      %p306 = scmp.eq.s32.totalorder %s40, 0
      %p307 = por %p305, %p306
      %p308 = scmp.ne.s32.totalorder %s296, %s297
      %p309 = scmp.eq.s32.totalorder %s41, 1
      %p310 = por %p308, %p309
      %p312 = scmp.ne.s32.totalorder %s297, %s311
      %p313 = scmp.eq.s32.totalorder %s41, 0
      %p314 = por %p312, %p313
      %s316 = sadd.s32 %s315, 1
      %p319 = scmp.eq.s32.totalorder %s35, 1
      %p320 = scmp.ne.s32.totalorder %s315, %s317
      %p321 = scmp.eq.s32.totalorder %s35, 0
      %p322 = por %p320, %p321
      %p323 = scmp.ne.s32.totalorder %s315, %s317
      %p324 = scmp.eq.s32.totalorder %s40, 1
      %p325 = por %p323, %p324
      %p326 = scmp.ne.s32.totalorder %s317, %s318
      %p327 = scmp.eq.s32.totalorder %s40, 0
      %p328 = por %p326, %p327
      %p329 = scmp.ne.s32.totalorder %s317, %s318
      %p330 = scmp.eq.s32.totalorder %s41, 1
      %p331 = por %p329, %p330
      %p333 = scmp.ne.s32.totalorder %s318, %s332
      %p334 = scmp.eq.s32.totalorder %s41, 0
      %p335 = por %p333, %p334
      %s337 = sadd.s32 %s336, 1
      %p340 = scmp.eq.s32.totalorder %s35, 1
      %p341 = scmp.ne.s32.totalorder %s336, %s338
      %p342 = scmp.eq.s32.totalorder %s35, 0
      %p343 = por %p341, %p342
      %p344 = scmp.ne.s32.totalorder %s336, %s338
      %p345 = scmp.eq.s32.totalorder %s40, 1
      %p346 = por %p344, %p345
      %p347 = scmp.ne.s32.totalorder %s338, %s339
      %p348 = scmp.eq.s32.totalorder %s40, 0
      %p349 = por %p347, %p348
      %p350 = scmp.ne.s32.totalorder %s338, %s339
      %p351 = scmp.eq.s32.totalorder %s41, 1
      %p352 = por %p350, %p351
      %p354 = scmp.ne.s32.totalorder %s339, %s353
      %p355 = scmp.eq.s32.totalorder %s41, 0
      %p356 = por %p354, %p355
      %s358 = sadd.s32 %s357, 1
      %p361 = scmp.eq.s32.totalorder %s35, 1
      %p362 = scmp.ne.s32.totalorder %s357, %s359
      %p363 = scmp.eq.s32.totalorder %s35, 0
      %p364 = por %p362, %p363
      %p365 = scmp.ne.s32.totalorder %s357, %s359
      %p366 = scmp.eq.s32.totalorder %s40, 1
      %p367 = por %p365, %p366
      %p368 = scmp.ne.s32.totalorder %s359, %s360
      %p369 = scmp.eq.s32.totalorder %s40, 0
      %p370 = por %p368, %p369
      %p371 = scmp.ne.s32.totalorder %s359, %s360
      %p372 = scmp.eq.s32.totalorder %s41, 1
      %p373 = por %p371, %p372
      %p375 = scmp.ne.s32.totalorder %s360, %s374
      %p376 = scmp.eq.s32.totalorder %s41, 0
      %p377 = por %p375, %p376
      %s378 = ssub.s32 %s35, %s42
      %p379 = scmp.eq.s32.totalorder %s378, 0
      %s381 = sadd.s32 %s380, 1
      %s382 = scalar_select %p379, %s380, %s381
      %p385 = pneg %p379
      %p386 = scmp.eq.s32.totalorder %s35, 1
      %p387 = por %p385, %p386
      %p388 = scmp.ne.s32.totalorder %s380, %s383
      %p389 = scmp.eq.s32.totalorder %s35, 0
      %p390 = por %p388, %p389
      %p391 = scmp.ne.s32.totalorder %s380, %s383
      %p392 = scmp.eq.s32.totalorder %s40, 1
      %p393 = por %p391, %p392
      %p394 = scmp.ne.s32.totalorder %s383, %s384
      %p395 = scmp.eq.s32.totalorder %s40, 0
      %p396 = por %p394, %p395
      %p397 = scmp.ne.s32.totalorder %s383, %s384
      %p398 = scmp.eq.s32.totalorder %s41, 1
      %p399 = por %p397, %p398
      %p401 = scmp.ne.s32.totalorder %s384, %s400
      %p402 = scmp.eq.s32.totalorder %s41, 0
      %p403 = por %p401, %p402
      %p404 = scmp.le.s32.totalorder 1, %s35
      %p405 = scmp.lt.s32.totalorder %s35, 3
      %p406 = pnand %p404, %p405
      %p407 = pneg %p406
      // Predicated region
      $region9: #{graph_encoder_decoder_attention.1} parent=5 // pred_check
        _
      $region10: #{graph_encoder_decoder_attention.1} parent=5 // pred_check_branch
        %409 = sbr.rel (%p406) target = $region12
      $region11: #{graph_encoder_decoder_attention.1} parent=5 // pred_region
        %s410 = ssub.s32 %s35, 1
        // Predicated region
        $region13: #{graph_encoder_decoder_attention.1} parent=11 // pred_check
          %p411 = pneg %p160
        $region14: #{graph_encoder_decoder_attention.1} parent=11 // pred_check_branch
          %413 = sbr.rel (%p411) target = $region16
        $region15: #{graph_encoder_decoder_attention.1} parent=11 // pred_region
          _
        $region16: #{graph_encoder_decoder_attention.1} parent=11 // pred_fallthru
          _
        // Predicated region
        $region17: #{graph_encoder_decoder_attention.1} parent=11 // pred_check
          %p414 = pneg %p181
        $region18: #{graph_encoder_decoder_attention.1} parent=11 // pred_check_branch
          %416 = sbr.rel (%p414) target = $region20
        $region19: #{graph_encoder_decoder_attention.1} parent=11 // pred_region
          _
        $region20: #{graph_encoder_decoder_attention.1} parent=11 // pred_fallthru
          _
        // Predicated region
        $region21: #{graph_encoder_decoder_attention.1} parent=11 // pred_check
          %p417 = pneg %p202
        $region22: #{graph_encoder_decoder_attention.1} parent=11 // pred_check_branch
          %419 = sbr.rel (%p417) target = $region24
        $region23: #{graph_encoder_decoder_attention.1} parent=11 // pred_region
          %421 = vsyncadd [#allocation10], 0
          %s422 = sshll.u32 %s6, 4
          %s423 = int_to_ptr.hbm [resolvable:$true] %s422
          %s424 = sshll.u32 [#allocation11], 4
          %s425 = int_to_ptr.vmem [resolvable:$true] %s424
          %430 = dma.hbm_to_vmem [thread:$0]  %s423, 512, %s425, [#allocation10], 128, 128, 8
        $region24: #{graph_encoder_decoder_attention.1} parent=11 // pred_fallthru
          _
        // Predicated region
        $region25: #{graph_encoder_decoder_attention.1} parent=11 // pred_check
          %p431 = pneg %p223
        $region26: #{graph_encoder_decoder_attention.1} parent=11 // pred_check_branch
          %433 = sbr.rel (%p431) target = $region28
        $region27: #{graph_encoder_decoder_attention.1} parent=11 // pred_region
          _
        $region28: #{graph_encoder_decoder_attention.1} parent=11 // pred_fallthru
          _
        // Predicated region
        $region29: #{graph_encoder_decoder_attention.1} parent=11 // pred_check
          %p434 = pneg %p244
        $region30: #{graph_encoder_decoder_attention.1} parent=11 // pred_check_branch
          %436 = sbr.rel (%p434) target = $region32
        $region31: #{graph_encoder_decoder_attention.1} parent=11 // pred_region
          %438 = vsyncadd [#allocation13], 0
          %s439 = sshll.u32 %s8, 4
          %s440 = int_to_ptr.hbm [resolvable:$true] %s439
          %s441 = sshll.u32 [#allocation12], 4
          %s442 = int_to_ptr.vmem [resolvable:$true] %s441
          %447 = dma.hbm_to_vmem [thread:$0]  %s440, 512, %s442, [#allocation13], 128, 128, 8
        $region32: #{graph_encoder_decoder_attention.1} parent=11 // pred_fallthru
          _
        // Predicated region
        $region33: #{graph_encoder_decoder_attention.1} parent=11 // pred_check
          %p448 = pneg %p265
        $region34: #{graph_encoder_decoder_attention.1} parent=11 // pred_check_branch
          %450 = sbr.rel (%p448) target = $region36
        $region35: #{graph_encoder_decoder_attention.1} parent=11 // pred_region
          %452 = vsyncadd [#allocation13], 0
          %s453 = sshll.u32 %s9, 4
          %s454 = int_to_ptr.hbm [resolvable:$true] %s453
          %s455 = sshll.u32 [#allocation14], 4
          %s456 = int_to_ptr.vmem [resolvable:$true] %s455
          %461 = dma.hbm_to_vmem [thread:$0]  %s454, 512, %s456, [#allocation13], 128, 128, 8
        $region36: #{graph_encoder_decoder_attention.1} parent=11 // pred_fallthru
          _
        // Predicated region
        $region37: #{graph_encoder_decoder_attention.1} parent=11 // pred_check
          %p462 = pneg %p286
        $region38: #{graph_encoder_decoder_attention.1} parent=11 // pred_check_branch
          %464 = sbr.rel (%p462) target = $region40
        $region39: #{graph_encoder_decoder_attention.1} parent=11 // pred_region
          _
        $region40: #{graph_encoder_decoder_attention.1} parent=11 // pred_fallthru
          _
        // Predicated region
        $region41: #{graph_encoder_decoder_attention.1} parent=11 // pred_check
          %p465 = pneg %p307
        $region42: #{graph_encoder_decoder_attention.1} parent=11 // pred_check_branch
          %467 = sbr.rel (%p465) target = $region44
        $region43: #{graph_encoder_decoder_attention.1} parent=11 // pred_region
          _
        $region44: #{graph_encoder_decoder_attention.1} parent=11 // pred_fallthru
          _
        // Predicated region
        $region45: #{graph_encoder_decoder_attention.1} parent=11 // pred_check
          %p468 = pneg %p328
        $region46: #{graph_encoder_decoder_attention.1} parent=11 // pred_check_branch
          %470 = sbr.rel (%p468) target = $region48
        $region47: #{graph_encoder_decoder_attention.1} parent=11 // pred_region
          _
        $region48: #{graph_encoder_decoder_attention.1} parent=11 // pred_fallthru
          _
        // Predicated region
        $region49: #{graph_encoder_decoder_attention.1} parent=11 // pred_check
          %p471 = pneg %p349
        $region50: #{graph_encoder_decoder_attention.1} parent=11 // pred_check_branch
          %473 = sbr.rel (%p471) target = $region52
        $region51: #{graph_encoder_decoder_attention.1} parent=11 // pred_region
          %475 = vsyncadd [#allocation16], 0
          %s476 = sshll.u32 %s13, 4
          %s477 = int_to_ptr.hbm [resolvable:$true] %s476
          %s478 = sshll.u32 [#allocation15], 4
          %s479 = int_to_ptr.vmem [resolvable:$true] %s478
          %484 = dma.hbm_to_vmem [thread:$0]  %s477, 512, %s479, [#allocation16], 128, 128, 8
        $region52: #{graph_encoder_decoder_attention.1} parent=11 // pred_fallthru
          _
        // Predicated region
        $region53: #{graph_encoder_decoder_attention.1} parent=11 // pred_check
          %p485 = pneg %p370
        $region54: #{graph_encoder_decoder_attention.1} parent=11 // pred_check_branch
          %487 = sbr.rel (%p485) target = $region56
        $region55: #{graph_encoder_decoder_attention.1} parent=11 // pred_region
          _
        $region56: #{graph_encoder_decoder_attention.1} parent=11 // pred_fallthru
          _
      $region12: #{graph_encoder_decoder_attention.1} parent=5 // pred_fallthru
        _
      %p488 = scmp.lt.s32.totalorder %s35, 2
      // Predicated region
      $region57: #{graph_encoder_decoder_attention.1} parent=5 // pred_check
        %p489 = pneg %p488
      $region58: #{graph_encoder_decoder_attention.1} parent=5 // pred_check_branch
        %491 = sbr.rel (%p489) target = $region60
      $region59: #{graph_encoder_decoder_attention.1} parent=5 // pred_region
        // Predicated region
        $region61: #{graph_encoder_decoder_attention.1} parent=59 // pred_check
          %p492 = pneg %p55
        $region62: #{graph_encoder_decoder_attention.1} parent=59 // pred_check_branch
          %494 = sbr.rel (%p492) target = $region64
        $region63: #{graph_encoder_decoder_attention.1} parent=59 // pred_region
          %s495 = sand.u32 %s45, 1
          %s496 = scalar_lea.sflag [#allocation4], %s495
          %s497 = sand.u32 %s45, 1
          %s498 = smul.addr %s497, 8
          %s499 = scalar_lea.vmem [#allocation3], %s498
          %501 = vsyncadd %s496, 0
          %s502 = smul.addr %s35, 8
          %s503 = scalar_lea.hbm %s0, %s502
          %s505 = sshll.u32 %s503, 4
          %s506 = int_to_ptr.hbm [resolvable:$true] %s505
          %s507 = sshll.u32 %s499, 4
          %s508 = int_to_ptr.vmem [resolvable:$true] %s507
          %510 = dma.hbm_to_vmem [thread:$0]  %s506, 128, %s508, %s496
        $region64: #{graph_encoder_decoder_attention.1} parent=59 // pred_fallthru
          _
        // Predicated region
        $region65: #{graph_encoder_decoder_attention.1} parent=59 // pred_check
          %p511 = pneg %p81
        $region66: #{graph_encoder_decoder_attention.1} parent=59 // pred_check_branch
          %513 = sbr.rel (%p511) target = $region68
        $region67: #{graph_encoder_decoder_attention.1} parent=59 // pred_region
          %s514 = sand.u32 %s35, 1
          %s515 = scalar_lea.sflag [#allocation7], %s514
          %s516 = sand.u32 %s71, 1
          %s517 = smul.addr %s516, 8
          %s518 = scalar_lea.vmem [#allocation6], %s517
          %520 = vsyncadd %s515, 0
          %s521 = smul.addr %s35, 8
          %s522 = scalar_lea.hbm %s1, %s521
          %s524 = sshll.u32 %s522, 4
          %s525 = int_to_ptr.hbm [resolvable:$true] %s524
          %s526 = sshll.u32 %s518, 4
          %s527 = int_to_ptr.vmem [resolvable:$true] %s526
          %529 = dma.hbm_to_vmem [thread:$0]  %s525, 128, %s527, %s515
        $region68: #{graph_encoder_decoder_attention.1} parent=59 // pred_fallthru
          _
        // Predicated region
        $region69: #{graph_encoder_decoder_attention.1} parent=59 // pred_check
          %p530 = pneg %p107
        $region70: #{graph_encoder_decoder_attention.1} parent=59 // pred_check_branch
          %532 = sbr.rel (%p530) target = $region72
        $region71: #{graph_encoder_decoder_attention.1} parent=59 // pred_region
          %s533 = sand.u32 %s35, 1
          %s534 = scalar_lea.sflag [#allocation7], %s533
          %s535 = sand.u32 %s97, 1
          %s536 = smul.addr %s535, 8
          %s537 = scalar_lea.vmem [#allocation8], %s536
          %539 = vsyncadd %s534, 0
          %s540 = smul.addr %s35, 8
          %s541 = scalar_lea.hbm %s2, %s540
          %s543 = sshll.u32 %s541, 4
          %s544 = int_to_ptr.hbm [resolvable:$true] %s543
          %s545 = sshll.u32 %s537, 4
          %s546 = int_to_ptr.vmem [resolvable:$true] %s545
          %548 = dma.hbm_to_vmem [thread:$0]  %s544, 128, %s546, %s534
        $region72: #{graph_encoder_decoder_attention.1} parent=59 // pred_fallthru
          _
        // Predicated region
        $region73: #{graph_encoder_decoder_attention.1} parent=59 // pred_check
          %p549 = pneg %p133
        $region74: #{graph_encoder_decoder_attention.1} parent=59 // pred_check_branch
          %551 = sbr.rel (%p549) target = $region76
        $region75: #{graph_encoder_decoder_attention.1} parent=59 // pred_region
          %s552 = sand.u32 %s35, 1
          %s553 = scalar_lea.sflag [#allocation10], %s552
          %s554 = sand.u32 %s123, 1
          %s555 = smul.addr %s554, 8
          %s556 = scalar_lea.vmem [#allocation9], %s555
          %558 = vsyncadd %s553, 0
          %s559 = smul.addr %s35, 8
          %s560 = scalar_lea.hbm %s3, %s559
          %s562 = sshll.u32 %s560, 4
          %s563 = int_to_ptr.hbm [resolvable:$true] %s562
          %s564 = sshll.u32 %s556, 4
          %s565 = int_to_ptr.vmem [resolvable:$true] %s564
          %567 = dma.hbm_to_vmem [thread:$0]  %s563, 128, %s565, %s553
        $region76: #{graph_encoder_decoder_attention.1} parent=59 // pred_fallthru
          _
      $region60: #{graph_encoder_decoder_attention.1} parent=5 // pred_fallthru
        _
      %p568 = scmp.le.s32.totalorder 1, %s35
      %p569 = scmp.lt.s32.totalorder %s35, 3
      %p570 = pnand %p568, %p569
      %p571 = pneg %p570
      // Predicated region
      $region77: #{graph_encoder_decoder_attention.1} parent=5 // pred_check
        _
      $region78: #{graph_encoder_decoder_attention.1} parent=5 // pred_check_branch
        %573 = sbr.rel (%p570) target = $region80
      $region79: #{graph_encoder_decoder_attention.1} parent=5 // pred_region
        %s574 = ssub.s32 %s35, 1
        %s575 = sand.u32 %s48, 1
        %s576 = scalar_lea.sflag [#allocation4], %s575
        %s577 = sand.u32 %s48, 1
        %s578 = smul.addr %s577, 8
        %s579 = scalar_lea.vmem [#allocation3], %s578
        // Predicated region
        $region81: #{graph_encoder_decoder_attention.1} parent=79 // pred_check
          %p580 = pneg %p61
        $region82: #{graph_encoder_decoder_attention.1} parent=79 // pred_check_branch
          %582 = sbr.rel (%p580) target = $region84
        $region83: #{graph_encoder_decoder_attention.1} parent=79 // pred_region
          %584 = dma.done %s576, 128
        $region84: #{graph_encoder_decoder_attention.1} parent=79 // pred_fallthru
          _
        %s585 = sand.u32 %s40, 1
        %s586 = scalar_lea.sflag [#allocation7], %s585
        %s587 = sand.u32 %s74, 1
        %s588 = smul.addr %s587, 8
        %s589 = scalar_lea.vmem [#allocation6], %s588
        // Predicated region
        $region85: #{graph_encoder_decoder_attention.1} parent=79 // pred_check
          %p590 = pneg %p87
        $region86: #{graph_encoder_decoder_attention.1} parent=79 // pred_check_branch
          %592 = sbr.rel (%p590) target = $region88
        $region87: #{graph_encoder_decoder_attention.1} parent=79 // pred_region
          %594 = dma.done %s586, 128
        $region88: #{graph_encoder_decoder_attention.1} parent=79 // pred_fallthru
          _
        %s595 = sand.u32 %s40, 1
        %s596 = scalar_lea.sflag [#allocation7], %s595
        %s597 = sand.u32 %s100, 1
        %s598 = smul.addr %s597, 8
        %s599 = scalar_lea.vmem [#allocation8], %s598
        // Predicated region
        $region89: #{graph_encoder_decoder_attention.1} parent=79 // pred_check
          %p600 = pneg %p113
        $region90: #{graph_encoder_decoder_attention.1} parent=79 // pred_check_branch
          %602 = sbr.rel (%p600) target = $region92
        $region91: #{graph_encoder_decoder_attention.1} parent=79 // pred_region
          %604 = dma.done %s596, 128
        $region92: #{graph_encoder_decoder_attention.1} parent=79 // pred_fallthru
          _
        %s605 = sand.u32 %s40, 1
        %s606 = scalar_lea.sflag [#allocation10], %s605
        %s607 = sand.u32 %s126, 1
        %s608 = smul.addr %s607, 8
        %s609 = scalar_lea.vmem [#allocation9], %s608
        // Predicated region
        $region93: #{graph_encoder_decoder_attention.1} parent=79 // pred_check
          %p610 = pneg %p139
        $region94: #{graph_encoder_decoder_attention.1} parent=79 // pred_check_branch
          %612 = sbr.rel (%p610) target = $region96
        $region95: #{graph_encoder_decoder_attention.1} parent=79 // pred_region
          %614 = dma.done %s606, 128
        $region96: #{graph_encoder_decoder_attention.1} parent=79 // pred_fallthru
          _
        // Predicated region
        $region97: #{graph_encoder_decoder_attention.1} parent=79 // pred_check
          %p615 = pneg %p202
        $region98: #{graph_encoder_decoder_attention.1} parent=79 // pred_check_branch
          %617 = sbr.rel (%p615) target = $region100
        $region99: #{graph_encoder_decoder_attention.1} parent=79 // pred_region
          %619 = dma.done [#allocation10], 512
        $region100: #{graph_encoder_decoder_attention.1} parent=79 // pred_fallthru
          _
        // Predicated region
        $region101: #{graph_encoder_decoder_attention.1} parent=79 // pred_check
          %p620 = pneg %p244
        $region102: #{graph_encoder_decoder_attention.1} parent=79 // pred_check_branch
          %622 = sbr.rel (%p620) target = $region104
        $region103: #{graph_encoder_decoder_attention.1} parent=79 // pred_region
          %624 = dma.done [#allocation13], 512
        $region104: #{graph_encoder_decoder_attention.1} parent=79 // pred_fallthru
          _
        // Predicated region
        $region105: #{graph_encoder_decoder_attention.1} parent=79 // pred_check
          %p625 = pneg %p265
        $region106: #{graph_encoder_decoder_attention.1} parent=79 // pred_check_branch
          %627 = sbr.rel (%p625) target = $region108
        $region107: #{graph_encoder_decoder_attention.1} parent=79 // pred_region
          %629 = dma.done [#allocation13], 512
        $region108: #{graph_encoder_decoder_attention.1} parent=79 // pred_fallthru
          _
        // Predicated region
        $region109: #{graph_encoder_decoder_attention.1} parent=79 // pred_check
          %p630 = pneg %p349
        $region110: #{graph_encoder_decoder_attention.1} parent=79 // pred_check_branch
          %632 = sbr.rel (%p630) target = $region112
        $region111: #{graph_encoder_decoder_attention.1} parent=79 // pred_region
          %634 = dma.done [#allocation16], 512
        $region112: #{graph_encoder_decoder_attention.1} parent=79 // pred_fallthru
          _
        %s635 = sand.u32 %s48, 1
        %s636 = scalar_lea.sflag [#allocation4], %s635
        %s637 = sand.u32 %s48, 1
        %s638 = smul.addr %s637, 8
        %s639 = scalar_lea.vmem [#allocation3], %s638
        %p640 = pneg %p61
        %p641 = pneg %p58
        %s642 = sand.u32 %s40, 1
        %s643 = scalar_lea.sflag [#allocation7], %s642
        %s644 = sand.u32 %s74, 1
        %s645 = smul.addr %s644, 8
        %s646 = scalar_lea.vmem [#allocation6], %s645
        %p647 = pneg %p87
        %p648 = pneg %p84
        %s649 = sand.u32 %s40, 1
        %s650 = scalar_lea.sflag [#allocation7], %s649
        %s651 = sand.u32 %s100, 1
        %s652 = smul.addr %s651, 8
        %s653 = scalar_lea.vmem [#allocation8], %s652
        %p654 = pneg %p113
        %p655 = pneg %p110
        %s656 = sand.u32 %s40, 1
        %s657 = scalar_lea.sflag [#allocation10], %s656
        %s658 = sand.u32 %s126, 1
        %s659 = smul.addr %s658, 8
        %s660 = scalar_lea.vmem [#allocation9], %s659
        %p661 = pneg %p139
        %p662 = pneg %p136
        %p663 = pneg %p160
        %p664 = pneg %p157
        %p665 = pneg %p181
        %p666 = pneg %p178
        %p667 = pneg %p202
        %p668 = pneg %p199
        %p669 = pneg %p223
        %p670 = pneg %p220
        %p671 = pneg %p244
        %p672 = pneg %p241
        %p673 = pneg %p265
        %p674 = pneg %p262
        %p675 = pneg %p286
        %p676 = pneg %p283
        %p677 = pneg %p307
        %p678 = pneg %p304
        %p679 = pneg %p328
        %p680 = pneg %p325
        %p681 = pneg %p349
        %p682 = pneg %p346
        %p683 = pneg %p370
        %p684 = pneg %p367
        %p685 = pneg %p396
        %p686 = pneg %p393
        %s687 = sand.u32 %s383, 1
        %s688 = scalar_lea.sflag [#allocation5], %s687
        %s689 = sand.u32 %s383, 1
        %s690 = smul.addr %s689, 8
        %s691 = scalar_lea.vmem [#allocation17], %s690
        %v692 = vld [vmem:[%s579] sm:$0xff]
        %v693 = vld [vmem:[%s589] sm:$0xff]
        %v694 = vld [vmem:[%s599] sm:$0xff]
        %v695 = vld [vmem:[%s609] sm:$0xff]
        %v696 = vld [vmem:[%s4] sm:$0xff]
        %v697 = vld [vmem:[%s4 + $0x8] sm:$0xff]
        %v698 = vld [vmem:[%s4 + $0x10] sm:$0xff]
        %v699 = vld [vmem:[%s4 + $0x18] sm:$0xff]
        %vm700 = vcmask 261120
        %v702 = vsel %vm700, %v693, 0
        %704 = vmatpush.msra.mxu0 0.0
        %705 = vmatpush.msra.mxu0 0.0
        %706 = vmatpush.msra.mxu0 0.0
        %707 = vmatpush.msra.mxu0 0.0
        %708 = vmatpush.msra.mxu0 0.0
        %709 = vmatpush.msra.mxu0 0.0
        %710 = vmatpush.msra.mxu0 0.0
        %711 = vmatpush.msra.mxu0 0.0
        %712 = vmatpush.msra.mxu0 0.0
        %713 = vmatpush.msra.mxu0 0.0
        %714 = vmatpush.msra.mxu0 0.0
        %715 = vmatpush.msra.mxu0 0.0
        %716 = vmatpush.msra.mxu0 %v699
        %717 = vmatpush.msra.mxu0 %v698
        %718 = vmatpush.msra.mxu0 %v697
        %719 = vmatpush.msra.mxu0 %v696
        %720 = vmatmul.f32.gmra.mxu0 %v702
        %v721 = vpop.f32.mrf.mxu0
        %v722 = vadd.f32 0.0, %v721
        %723 = vdwg.mxu0
        %v724 = vld [vmem:[%s11] sm:$0x1]
        %v726 = vperm.slane %v724, 0
        %727 = vrot.lane.b32.xlu0 %v726, 32
        %v728 = vpop.permute.xlu0 %727
        %v730 = vadd.f32 %v722, %v728
        %v731 = vld [vmem:[%s5] sm:$0xff]
        %v732 = vld [vmem:[%s5 + $0x8] sm:$0xff]
        %v733 = vld [vmem:[%s5 + $0x10] sm:$0xff]
        %v734 = vld [vmem:[%s5 + $0x18] sm:$0xff]
        %v736 = vsel %vm700, %v692, 0
        %738 = vmatpush.msra.mxu0 0.0
        %739 = vmatpush.msra.mxu0 0.0
        %740 = vmatpush.msra.mxu0 0.0
        %741 = vmatpush.msra.mxu0 0.0
        %742 = vmatpush.msra.mxu0 0.0
        %743 = vmatpush.msra.mxu0 0.0
        %744 = vmatpush.msra.mxu0 0.0
        %745 = vmatpush.msra.mxu0 0.0
        %746 = vmatpush.msra.mxu0 0.0
        %747 = vmatpush.msra.mxu0 0.0
        %748 = vmatpush.msra.mxu0 0.0
        %749 = vmatpush.msra.mxu0 0.0
        %750 = vmatpush.msra.mxu0 %v734
        %751 = vmatpush.msra.mxu0 %v733
        %752 = vmatpush.msra.mxu0 %v732
        %753 = vmatpush.msra.mxu0 %v731
        %754 = vmatmul.f32.gmra.mxu0 %v736
        %v755 = vpop.f32.mrf.mxu0
        %v756 = vadd.f32 0.0, %v755
        %757 = vdwg.mxu0
        %758 = vxpose.xlu0.b32.start [1/16] %v756, 128
        %759 = vxpose.xlu0.b32.cont [2/16] 0.0, 128
        %760 = vxpose.xlu0.b32.cont [3/16] 0.0, 128
        %761 = vxpose.xlu0.b32.cont [4/16] 0.0, 128
        %762 = vxpose.xlu0.b32.cont [5/16] 0.0, 128
        %763 = vxpose.xlu0.b32.cont [6/16] 0.0, 128
        %764 = vxpose.xlu0.b32.cont [7/16] 0.0, 128
        %765 = vxpose.xlu0.b32.cont [8/16] 0.0, 128
        %766 = vxpose.xlu0.b32.cont [9/16] 0.0, 128
        %767 = vxpose.xlu0.b32.cont [10/16] 0.0, 128
        %768 = vxpose.xlu0.b32.cont [11/16] 0.0, 128
        %769 = vxpose.xlu0.b32.cont [12/16] 0.0, 128
        %770 = vxpose.xlu0.b32.cont [13/16] 0.0, 128
        %771 = vxpose.xlu0.b32.cont [14/16] 0.0, 128
        %772 = vxpose.xlu0.b32.cont [15/16] 0.0, 128
        %773 = vxpose.xlu0.b32.end [16/16] 0.0, 128
        %v774 = vpop.trf.xlu0
        %v775 = vpop.trf.xlu0
        %v776 = vpop.trf.xlu0
        %v777 = vpop.trf.xlu0
        %v778 = vpop.trf.xlu0
        %v779 = vpop.trf.xlu0
        %v780 = vpop.trf.xlu0
        %v781 = vpop.trf.xlu0
        %v782 = vpop.trf.xlu0
        %v783 = vpop.trf.xlu0
        %v784 = vpop.trf.xlu0
        %v785 = vpop.trf.xlu0
        %v786 = vpop.trf.xlu0
        %v787 = vpop.trf.xlu0
        %v788 = vpop.trf.xlu0
        %v789 = vpop.trf.xlu0
        %791 = vset.pattern.permute.xlu0 64
        %792 = vperm.xlu0 %791, %v722
        %v793 = vpop.permute.xlu0 %792
        %v795 = vperm.slane %v774, 0
        %v796 = vadd.f32 %v793, %v795
        %vm797 = vcmp.gt.f32.partialorder %v796, 0.0
        %v798 = vmul.f32 %v796, 0.1
        %v799 = vsel %vm797, %v796, %v798
        %vm800 = vcmp.gt.f32.partialorder %v695, 0.0
        %v801 = vsel %vm800, %v799, -9e+15
        %vm802 = vcmask 64512
        %v803 = vsel %vm802, %v801, -inf
        %804 = vmax.xlane.f32.xlu0 %v803
        %v805 = vpop.xlane.xlu0 %804
        %v806 = vsub.f32 %v801, %v805
        %v807 = vmul.f32 %v806, 1.442695
        %v808 = vpow.pop %v807
        %v809 = vsel %vm802, %v808, 0.0
        %810 = vadd.xlane.f32.xlu0 %v809
        %v811 = vpop.xlane.xlu0 %810
        %v812 = vrcp.pop %v811
        %v813 = vmul.f32 %v808, %v812
        %v815 = vsel %vm802, %v813, 0
        %817 = vmatpush.msra.mxu0 0.0
        %818 = vmatpush.msra.mxu0 0.0
        %819 = vmatpush.msra.mxu0 0.0
        %820 = vmatpush.msra.mxu0 0.0
        %821 = vmatpush.msra.mxu0 0.0
        %822 = vmatpush.msra.mxu0 0.0
        %823 = vmatpush.msra.mxu0 0.0
        %824 = vmatpush.msra.mxu0 0.0
        %825 = vmatpush.msra.mxu0 0.0
        %826 = vmatpush.msra.mxu0 0.0
        %827 = vmatpush.msra.mxu0 0.0
        %828 = vmatpush.msra.mxu0 0.0
        %829 = vmatpush.msra.mxu0 0.0
        %830 = vmatpush.msra.mxu0 0.0
        %831 = vmatpush.msra.mxu0 0.0
        %832 = vmatpush.msra.mxu0 %v722
        %833 = vmatmul.f32.gmra.mxu0 %v815
        %v834 = vpop.f32.mrf.mxu0
        %v835 = vadd.f32 0.0, %v834
        %836 = vdwg.mxu0
        %837 = vst.msk [vmem:[#allocation2] sm:$0xff] %vm802, %v835
        %838 = vset.pattern.permute.xlu0 65
        %839 = vperm.xlu0 %838, %v722
        %v840 = vpop.permute.xlu0 %839
        %v842 = vperm.slane %v774, 1
        %v843 = vadd.f32 %v840, %v842
        %vm844 = vcmp.gt.f32.partialorder %v843, 0.0
        %v845 = vmul.f32 %v843, 0.1
        %v846 = vsel %vm844, %v843, %v845
        %v847 = vsel %vm800, %v846, -9e+15
        %v848 = vsel %vm802, %v847, -inf
        %849 = vmax.xlane.f32.xlu0 %v848
        %v850 = vpop.xlane.xlu0 %849
        %v851 = vsub.f32 %v847, %v850
        %v852 = vmul.f32 %v851, 1.442695
        %v853 = vpow.pop %v852
        %v854 = vsel %vm802, %v853, 0.0
        %855 = vadd.xlane.f32.xlu0 %v854
        %v856 = vpop.xlane.xlu0 %855
        %v857 = vrcp.pop %v856
        %v858 = vmul.f32 %v853, %v857
        %859 = vrot.lane.b32.xlu0 %v722, 120
        %v860 = vpop.permute.xlu0 %859
        %v863 = vsel %vm802, %v858, 0
        %865 = vmatpush.msra.mxu0 0.0
        %866 = vmatpush.msra.mxu0 0.0
        %867 = vmatpush.msra.mxu0 0.0
        %868 = vmatpush.msra.mxu0 0.0
        %869 = vmatpush.msra.mxu0 0.0
        %870 = vmatpush.msra.mxu0 0.0
        %871 = vmatpush.msra.mxu0 0.0
        %872 = vmatpush.msra.mxu0 0.0
        %873 = vmatpush.msra.mxu0 0.0
        %874 = vmatpush.msra.mxu0 0.0
        %875 = vmatpush.msra.mxu0 0.0
        %876 = vmatpush.msra.mxu0 0.0
        %877 = vmatpush.msra.mxu0 0.0
        %878 = vmatpush.msra.mxu0 0.0
        %879 = vmatpush.msra.mxu0 0.0
        %880 = vmatpush.msra.mxu0 %v860
        %881 = vmatmul.f32.gmra.mxu0 %v863
        %v882 = vpop.f32.mrf.mxu0
        %v883 = vadd.f32 0.0, %v882
        %884 = vdwg.mxu0
        %886 = vrot.lane.b32.xlu0 %v883, 8
        %v887 = vpop.permute.xlu0 %886
        %vm889 = vcmask 130112
        %890 = vst.msk [vmem:[#allocation2] sm:$0xff] %vm889, %v887
        %891 = vset.pattern.permute.xlu0 66
        %892 = vperm.xlu0 %891, %v722
        %v893 = vpop.permute.xlu0 %892
        %v895 = vperm.slane %v774, 2
        %v896 = vadd.f32 %v893, %v895
        %vm897 = vcmp.gt.f32.partialorder %v896, 0.0
        %v898 = vmul.f32 %v896, 0.1
        %v899 = vsel %vm897, %v896, %v898
        %v900 = vsel %vm800, %v899, -9e+15
        %v901 = vsel %vm802, %v900, -inf
        %902 = vmax.xlane.f32.xlu0 %v901
        %v903 = vpop.xlane.xlu0 %902
        %v904 = vsub.f32 %v900, %v903
        %v905 = vmul.f32 %v904, 1.442695
        %v906 = vpow.pop %v905
        %v907 = vsel %vm802, %v906, 0.0
        %908 = vadd.xlane.f32.xlu0 %v907
        %v909 = vpop.xlane.xlu0 %908
        %v910 = vrcp.pop %v909
        %v911 = vmul.f32 %v906, %v910
        %912 = vrot.lane.b32.xlu0 %v722, 112
        %v913 = vpop.permute.xlu0 %912
        %v916 = vsel %vm802, %v911, 0
        %918 = vmatpush.msra.mxu0 0.0
        %919 = vmatpush.msra.mxu0 0.0
        %920 = vmatpush.msra.mxu0 0.0
        %921 = vmatpush.msra.mxu0 0.0
        %922 = vmatpush.msra.mxu0 0.0
        %923 = vmatpush.msra.mxu0 0.0
        %924 = vmatpush.msra.mxu0 0.0
        %925 = vmatpush.msra.mxu0 0.0
        %926 = vmatpush.msra.mxu0 0.0
        %927 = vmatpush.msra.mxu0 0.0
        %928 = vmatpush.msra.mxu0 0.0
        %929 = vmatpush.msra.mxu0 0.0
        %930 = vmatpush.msra.mxu0 0.0
        %931 = vmatpush.msra.mxu0 0.0
        %932 = vmatpush.msra.mxu0 0.0
        %933 = vmatpush.msra.mxu0 %v913
        %934 = vmatmul.f32.gmra.mxu0 %v916
        %v935 = vpop.f32.mrf.mxu0
        %v936 = vadd.f32 0.0, %v935
        %937 = vdwg.mxu0
        %939 = vrot.lane.b32.xlu0 %v936, 16
        %v940 = vpop.permute.xlu0 %939
        %vm942 = vcmask 195712
        %943 = vst.msk [vmem:[#allocation2] sm:$0xff] %vm942, %v940
        %944 = vset.pattern.permute.xlu0 67
        %945 = vperm.xlu0 %944, %v722
        %v946 = vpop.permute.xlu0 %945
        %v948 = vperm.slane %v774, 3
        %v949 = vadd.f32 %v946, %v948
        %vm950 = vcmp.gt.f32.partialorder %v949, 0.0
        %v951 = vmul.f32 %v949, 0.1
        %v952 = vsel %vm950, %v949, %v951
        %v953 = vsel %vm800, %v952, -9e+15
        %v954 = vsel %vm802, %v953, -inf
        %955 = vmax.xlane.f32.xlu0 %v954
        %v956 = vpop.xlane.xlu0 %955
        %v957 = vsub.f32 %v953, %v956
        %v958 = vmul.f32 %v957, 1.442695
        %v959 = vpow.pop %v958
        %v960 = vsel %vm802, %v959, 0.0
        %961 = vadd.xlane.f32.xlu0 %v960
        %v962 = vpop.xlane.xlu0 %961
        %v963 = vrcp.pop %v962
        %v964 = vmul.f32 %v959, %v963
        %965 = vrot.lane.b32.xlu0 %v722, 104
        %v966 = vpop.permute.xlu0 %965
        %v969 = vsel %vm802, %v964, 0
        %971 = vmatpush.msra.mxu0 0.0
        %972 = vmatpush.msra.mxu0 0.0
        %973 = vmatpush.msra.mxu0 0.0
        %974 = vmatpush.msra.mxu0 0.0
        %975 = vmatpush.msra.mxu0 0.0
        %976 = vmatpush.msra.mxu0 0.0
        %977 = vmatpush.msra.mxu0 0.0
        %978 = vmatpush.msra.mxu0 0.0
        %979 = vmatpush.msra.mxu0 0.0
        %980 = vmatpush.msra.mxu0 0.0
        %981 = vmatpush.msra.mxu0 0.0
        %982 = vmatpush.msra.mxu0 0.0
        %983 = vmatpush.msra.mxu0 0.0
        %984 = vmatpush.msra.mxu0 0.0
        %985 = vmatpush.msra.mxu0 0.0
        %986 = vmatpush.msra.mxu0 %v966
        %987 = vmatmul.f32.gmra.mxu0 %v969
        %v988 = vpop.f32.mrf.mxu0
        %v989 = vadd.f32 0.0, %v988
        %990 = vdwg.mxu0
        %992 = vrot.lane.b32.xlu0 %v989, 24
        %v993 = vpop.permute.xlu0 %992
        %vm995 = vcmask 261312
        %996 = vst.msk [vmem:[#allocation2] sm:$0xff] %vm995, %v993
        %v997 = vld [vmem:[#allocation2] sm:$0xff]
        %vm998 = vcmp.gt.f32.partialorder %v997, 0.0
        %v999 = vmul.f32 %v997, 0.01
        %v1000 = vsel %vm998, %v997, %v999
        %v1001 = vadd.f32 %v692, %v1000
        %v1002 = vsel %vm700, %v1001, 0.0
        %1003 = vadd.xlane.f32.xlu0 %v1002
        %v1004 = vpop.xlane.xlu0 %1003
        %v1005 = vrcp.pop 32.0
        %v1006 = vmul.f32 32.0, %v1005
        %v1007 = vsub.f32 1.0, %v1006
        %v1008 = vmul.f32 %v1005, %v1007
        %v1009 = vadd.f32 %v1005, %v1008
        %vm1010 = vweird.f32 %v1005
        %v1011 = vsel %vm1010, %v1005, %v1009
        %v1012 = vmul.f32 %v1004, %v1011
        %v1013 = vsub.f32 %v1001, %v1012
        %v1014 = vmul.f32 %v1013, %v1013
        %v1015 = vsel %vm700, %v1014, 0.0
        %1016 = vadd.xlane.f32.xlu0 %v1015
        %v1017 = vpop.xlane.xlu0 %1016
        %v1018 = vmul.f32 %v1017, 0.032258064
        %v1019 = vrsqrt.pop %v1018
        %v1020 = vmul.f32 %v1019, %v1018
        %v1021 = vmul.f32 %v1020, %v1019
        %v1022 = vmul.f32 0.5, %v1021
        %v1023 = vsub.f32 1.5, %v1022
        %v1024 = vmul.f32 %v1019, %v1023
        %v1025 = vmul.f32 %v1018, %v1024
        %vm1026 = vcmp.eq.f32.partialorder %v1018, inf
        %v1027 = vsel %vm1026, %v1018, %v1025
        %vm1028 = vcmp.eq.f32.partialorder %v1018, 0.0
        %v1029 = vand.u32 %v1018, 2147483648
        %v1030 = vsel %vm1028, %v1029, %v1027
        %v1031 = vadd.f32 %v1030, 1e-06
        %v1032 = vrcp.pop %v1031
        %v1033 = vmul.f32 %v1031, %v1032
        %v1034 = vsub.f32 1.0, %v1033
        %v1035 = vmul.f32 %v1032, %v1034
        %v1036 = vadd.f32 %v1032, %v1035
        %vm1037 = vweird.f32 %v1031
        %vm1038 = vweird.f32 %v1032
        %vm1039 = vmor %vm1037, %vm1038
        %v1040 = vsel %vm1039, %v1032, %v1036
        %v1041 = vand.u32 2147483647, %v1031
        %vm1042 = vcmp.eq.f32.partialorder %v1041, 8.507059e+37
        %v1043 = vand.u32 %v1031, 2147483648
        %v1044 = vor.u32 1.1754944e-38, %v1043
        %v1045 = vsel %vm1042, %v1044, %v1040
        %v1046 = vmul.f32 %v1013, %v1045
        %v1047 = vsel %vm700, %v1046, 0.0
        %v1048 = vrot.slane %v1047, 4
        %v1049 = vadd.f32 %v1047, %v1048
        %v1050 = vrot.slane %v1049, 2
        %v1051 = vadd.f32 %v1049, %v1050
        %v1052 = vrot.slane %v1051, 1
        %v1053 = vadd.f32 %v1051, %v1052
        %v1054 = vrcp.pop 8.0
        %v1055 = vmul.f32 8.0, %v1054
        %v1056 = vsub.f32 1.0, %v1055
        %v1057 = vmul.f32 %v1054, %v1056
        %v1058 = vadd.f32 %v1054, %v1057
        %vm1059 = vweird.f32 %v1054
        %v1060 = vsel %vm1059, %v1054, %v1058
        %v1061 = vmul.f32 %v1053, %v1060
        %v1062 = vsub.f32 %v1046, %v1061
        %v1063 = vmul.f32 %v1062, %v1062
        %v1064 = vsel %vm700, %v1063, 0.0
        %v1065 = vrot.slane %v1064, 4
        %v1066 = vadd.f32 %v1064, %v1065
        %v1067 = vrot.slane %v1066, 2
        %v1068 = vadd.f32 %v1066, %v1067
        %v1069 = vrot.slane %v1068, 1
        %v1070 = vadd.f32 %v1068, %v1069
        %v1071 = vmul.f32 %v1070, 0.14285715
        %v1072 = vrsqrt.pop %v1071
        %v1073 = vmul.f32 %v1072, %v1071
        %v1074 = vmul.f32 %v1073, %v1072
        %v1075 = vmul.f32 0.5, %v1074
        %v1076 = vsub.f32 1.5, %v1075
        %v1077 = vmul.f32 %v1072, %v1076
        %v1078 = vmul.f32 %v1071, %v1077
        %vm1079 = vcmp.eq.f32.partialorder %v1071, inf
        %v1080 = vsel %vm1079, %v1071, %v1078
        %vm1081 = vcmp.eq.f32.partialorder %v1071, 0.0
        %v1082 = vand.u32 %v1071, 2147483648
        %v1083 = vsel %vm1081, %v1082, %v1080
        %v1084 = vadd.f32 %v1083, 1e-06
        %v1085 = vrcp.pop %v1084
        %v1086 = vmul.f32 %v1084, %v1085
        %v1087 = vsub.f32 1.0, %v1086
        %v1088 = vmul.f32 %v1085, %v1087
        %v1089 = vadd.f32 %v1085, %v1088
        %vm1090 = vweird.f32 %v1084
        %vm1091 = vweird.f32 %v1085
        %vm1092 = vmor %vm1090, %vm1091
        %v1093 = vsel %vm1092, %v1085, %v1089
        %v1094 = vand.u32 2147483647, %v1084
        %vm1095 = vcmp.eq.f32.partialorder %v1094, 8.507059e+37
        %v1096 = vand.u32 %v1084, 2147483648
        %v1097 = vor.u32 1.1754944e-38, %v1096
        %v1098 = vsel %vm1095, %v1097, %v1093
        %v1099 = vmul.f32 %v1062, %v1098
        %v1100 = vld [vmem:[#allocation11] sm:$0xff]
        %v1101 = vld [vmem:[#allocation11 + $0x8] sm:$0xff]
        %v1102 = vld [vmem:[#allocation11 + $0x10] sm:$0xff]
        %v1103 = vld [vmem:[#allocation11 + $0x18] sm:$0xff]
        %v1104 = vld [vmem:[%s7] sm:$0x1]
        %v1106 = vperm.slane %v1104, 0
        %v1109 = vsel %vm700, %v1099, 0
        %1111 = vmatpush.msra.mxu0 0.0
        %1112 = vmatpush.msra.mxu0 0.0
        %1113 = vmatpush.msra.mxu0 0.0
        %1114 = vmatpush.msra.mxu0 0.0
        %1115 = vmatpush.msra.mxu0 0.0
        %1116 = vmatpush.msra.mxu0 0.0
        %1117 = vmatpush.msra.mxu0 0.0
        %1118 = vmatpush.msra.mxu0 0.0
        %1119 = vmatpush.msra.mxu0 0.0
        %1120 = vmatpush.msra.mxu0 0.0
        %1121 = vmatpush.msra.mxu0 0.0
        %1122 = vmatpush.msra.mxu0 0.0
        %1123 = vmatpush.msra.mxu0 %v1103
        %1124 = vmatpush.msra.mxu0 %v1102
        %1125 = vmatpush.msra.mxu0 %v1101
        %1126 = vmatpush.msra.mxu0 %v1100
        %1127 = vmatmul.f32.gmra.mxu0 %v1109
        %v1128 = vpop.f32.mrf.mxu0
        %v1129 = vadd.f32 %v1106, %v1128
        %1130 = vdwg.mxu0
        %v1131 = vsel %vm700, %v1129, 0.0
        %1132 = vadd.xlane.f32.xlu0 %v1131
        %v1133 = vpop.xlane.xlu0 %1132
        %v1134 = vmul.f32 %v1133, %v1011
        %v1135 = vsub.f32 %v1129, %v1134
        %v1136 = vmul.f32 %v1135, %v1135
        %v1137 = vsel %vm700, %v1136, 0.0
        %1138 = vadd.xlane.f32.xlu0 %v1137
        %v1139 = vpop.xlane.xlu0 %1138
        %v1140 = vmul.f32 %v1139, 0.032258064
        %v1141 = vrsqrt.pop %v1140
        %v1142 = vmul.f32 %v1141, %v1140
        %v1143 = vmul.f32 %v1142, %v1141
        %v1144 = vmul.f32 0.5, %v1143
        %v1145 = vsub.f32 1.5, %v1144
        %v1146 = vmul.f32 %v1141, %v1145
        %v1147 = vmul.f32 %v1140, %v1146
        %vm1148 = vcmp.eq.f32.partialorder %v1140, inf
        %v1149 = vsel %vm1148, %v1140, %v1147
        %vm1150 = vcmp.eq.f32.partialorder %v1140, 0.0
        %v1151 = vand.u32 %v1140, 2147483648
        %v1152 = vsel %vm1150, %v1151, %v1149
        %v1153 = vadd.f32 %v1152, 1e-06
        %v1154 = vrcp.pop %v1153
        %v1155 = vmul.f32 %v1153, %v1154
        %v1156 = vsub.f32 1.0, %v1155
        %v1157 = vmul.f32 %v1154, %v1156
        %v1158 = vadd.f32 %v1154, %v1157
        %vm1159 = vweird.f32 %v1153
        %vm1160 = vweird.f32 %v1154
        %vm1161 = vmor %vm1159, %vm1160
        %v1162 = vsel %vm1161, %v1154, %v1158
        %v1163 = vand.u32 2147483647, %v1153
        %vm1164 = vcmp.eq.f32.partialorder %v1163, 8.507059e+37
        %v1165 = vand.u32 %v1153, 2147483648
        %v1166 = vor.u32 1.1754944e-38, %v1165
        %v1167 = vsel %vm1164, %v1166, %v1162
        %v1168 = vmul.f32 %v1135, %v1167
        %v1169 = vsel %vm700, %v1168, 0.0
        %v1170 = vrot.slane %v1169, 4
        %v1171 = vadd.f32 %v1169, %v1170
        %v1172 = vrot.slane %v1171, 2
        %v1173 = vadd.f32 %v1171, %v1172
        %v1174 = vrot.slane %v1173, 1
        %v1175 = vadd.f32 %v1173, %v1174
        %v1176 = vmul.f32 %v1175, %v1060
        %v1177 = vsub.f32 %v1168, %v1176
        %v1178 = vmul.f32 %v1177, %v1177
        %v1179 = vsel %vm700, %v1178, 0.0
        %v1180 = vrot.slane %v1179, 4
        %v1181 = vadd.f32 %v1179, %v1180
        %v1182 = vrot.slane %v1181, 2
        %v1183 = vadd.f32 %v1181, %v1182
        %v1184 = vrot.slane %v1183, 1
        %v1185 = vadd.f32 %v1183, %v1184
        %v1186 = vmul.f32 %v1185, 0.14285715
        %v1187 = vrsqrt.pop %v1186
        %v1188 = vmul.f32 %v1187, %v1186
        %v1189 = vmul.f32 %v1188, %v1187
        %v1190 = vmul.f32 0.5, %v1189
        %v1191 = vsub.f32 1.5, %v1190
        %v1192 = vmul.f32 %v1187, %v1191
        %v1193 = vmul.f32 %v1186, %v1192
        %vm1194 = vcmp.eq.f32.partialorder %v1186, inf
        %v1195 = vsel %vm1194, %v1186, %v1193
        %vm1196 = vcmp.eq.f32.partialorder %v1186, 0.0
        %v1197 = vand.u32 %v1186, 2147483648
        %v1198 = vsel %vm1196, %v1197, %v1195
        %v1199 = vadd.f32 %v1198, 1e-06
        %v1200 = vrcp.pop %v1199
        %v1201 = vmul.f32 %v1199, %v1200
        %v1202 = vsub.f32 1.0, %v1201
        %v1203 = vmul.f32 %v1200, %v1202
        %v1204 = vadd.f32 %v1200, %v1203
        %vm1205 = vweird.f32 %v1199
        %vm1206 = vweird.f32 %v1200
        %vm1207 = vmor %vm1205, %vm1206
        %v1208 = vsel %vm1207, %v1200, %v1204
        %v1209 = vand.u32 2147483647, %v1199
        %vm1210 = vcmp.eq.f32.partialorder %v1209, 8.507059e+37
        %v1211 = vand.u32 %v1199, 2147483648
        %v1212 = vor.u32 1.1754944e-38, %v1211
        %v1213 = vsel %vm1210, %v1212, %v1208
        %v1214 = vmul.f32 %v1177, %v1213
        %v1215 = vld [vmem:[#allocation12] sm:$0xff]
        %v1216 = vld [vmem:[#allocation12 + $0x8] sm:$0xff]
        %v1217 = vld [vmem:[#allocation12 + $0x10] sm:$0xff]
        %v1218 = vld [vmem:[#allocation12 + $0x18] sm:$0xff]
        %v1219 = vld [vmem:[%s10] sm:$0x1]
        %v1221 = vperm.slane %v1219, 0
        %v1224 = vsel %vm700, %v1214, 0
        %1226 = vmatpush.msra.mxu0 0.0
        %1227 = vmatpush.msra.mxu0 0.0
        %1228 = vmatpush.msra.mxu0 0.0
        %1229 = vmatpush.msra.mxu0 0.0
        %1230 = vmatpush.msra.mxu0 0.0
        %1231 = vmatpush.msra.mxu0 0.0
        %1232 = vmatpush.msra.mxu0 0.0
        %1233 = vmatpush.msra.mxu0 0.0
        %1234 = vmatpush.msra.mxu0 0.0
        %1235 = vmatpush.msra.mxu0 0.0
        %1236 = vmatpush.msra.mxu0 0.0
        %1237 = vmatpush.msra.mxu0 0.0
        %1238 = vmatpush.msra.mxu0 %v1218
        %1239 = vmatpush.msra.mxu0 %v1217
        %1240 = vmatpush.msra.mxu0 %v1216
        %1241 = vmatpush.msra.mxu0 %v1215
        %1242 = vmatmul.f32.gmra.mxu0 %v1224
        %v1243 = vpop.f32.mrf.mxu0
        %v1244 = vadd.f32 %v1221, %v1243
        %1245 = vdwg.mxu0
        %v1246 = vld [vmem:[#allocation14] sm:$0xff]
        %v1247 = vld [vmem:[#allocation14 + $0x8] sm:$0xff]
        %v1248 = vld [vmem:[#allocation14 + $0x10] sm:$0xff]
        %v1249 = vld [vmem:[#allocation14 + $0x18] sm:$0xff]
        %v1250 = vld [vmem:[%s12] sm:$0x1]
        %v1252 = vperm.slane %v1250, 0
        %v1255 = vsel %vm700, %v694, 0
        %1257 = vmatpush.msra.mxu0 0.0
        %1258 = vmatpush.msra.mxu0 0.0
        %1259 = vmatpush.msra.mxu0 0.0
        %1260 = vmatpush.msra.mxu0 0.0
        %1261 = vmatpush.msra.mxu0 0.0
        %1262 = vmatpush.msra.mxu0 0.0
        %1263 = vmatpush.msra.mxu0 0.0
        %1264 = vmatpush.msra.mxu0 0.0
        %1265 = vmatpush.msra.mxu0 0.0
        %1266 = vmatpush.msra.mxu0 0.0
        %1267 = vmatpush.msra.mxu0 0.0
        %1268 = vmatpush.msra.mxu0 0.0
        %1269 = vmatpush.msra.mxu0 %v1249
        %1270 = vmatpush.msra.mxu0 %v1248
        %1271 = vmatpush.msra.mxu0 %v1247
        %1272 = vmatpush.msra.mxu0 %v1246
        %1273 = vmatmul.f32.gmra.mxu0 %v1255
        %v1274 = vpop.f32.mrf.mxu0
        %v1275 = vadd.f32 %v1252, %v1274
        %1276 = vdwg.mxu0
        %1278 = vrot.lane.b32.xlu0 %v730, 96
        %v1279 = vpop.permute.xlu0 %1278
        %v1281 = vsel %vm802, %v1244, 0
        %v1283 = vsel %vm802, %v1279, 0
        %1285 = vmatpush.xpose.msra.mxu0 0.0
        %1286 = vmatpush.xpose.msra.mxu0 0.0
        %1287 = vmatpush.xpose.msra.mxu0 0.0
        %1288 = vmatpush.xpose.msra.mxu0 0.0
        %1289 = vmatpush.xpose.msra.mxu0 0.0
        %1290 = vmatpush.xpose.msra.mxu0 0.0
        %1291 = vmatpush.xpose.msra.mxu0 0.0
        %1292 = vmatpush.xpose.msra.mxu0 0.0
        %1293 = vmatpush.xpose.msra.mxu0 0.0
        %1294 = vmatpush.xpose.msra.mxu0 0.0
        %1295 = vmatpush.xpose.msra.mxu0 0.0
        %1296 = vmatpush.xpose.msra.mxu0 0.0
        %1297 = vmatpush.xpose.msra.mxu0 0.0
        %1298 = vmatpush.xpose.msra.mxu0 0.0
        %1299 = vmatpush.xpose.msra.mxu0 0.0
        %1300 = vmatpush.xpose.msra.mxu0 %v1283
        %1301 = vmatmul.f32.gmra.mxu0 %v1281
        %v1302 = vpop.f32.mrf.mxu0
        %v1303 = vadd.f32 0.0, %v1302
        %1304 = vdwg.mxu0
        %v1305 = vsel %vm802, %v1303, -inf
        %1306 = vmax.xlane.f32.xlu0 %v1305
        %v1307 = vpop.xlane.xlu0 %1306
        %v1308 = vsub.f32 %v1303, %v1307
        %v1309 = vmul.f32 %v1308, 1.442695
        %v1310 = vpow.pop %v1309
        %v1311 = vsel %vm802, %v1310, 0.0
        %1312 = vadd.xlane.f32.xlu0 %v1311
        %v1313 = vpop.xlane.xlu0 %1312
        %v1314 = vrcp.pop %v1313
        %v1315 = vmul.f32 %v1310, %v1314
        %v1317 = vsel %vm802, %v1315, 0
        %1319 = vmatpush.msra.mxu0 0.0
        %1320 = vmatpush.msra.mxu0 0.0
        %1321 = vmatpush.msra.mxu0 0.0
        %1322 = vmatpush.msra.mxu0 0.0
        %1323 = vmatpush.msra.mxu0 0.0
        %1324 = vmatpush.msra.mxu0 0.0
        %1325 = vmatpush.msra.mxu0 0.0
        %1326 = vmatpush.msra.mxu0 0.0
        %1327 = vmatpush.msra.mxu0 0.0
        %1328 = vmatpush.msra.mxu0 0.0
        %1329 = vmatpush.msra.mxu0 0.0
        %1330 = vmatpush.msra.mxu0 0.0
        %1331 = vmatpush.msra.mxu0 0.0
        %1332 = vmatpush.msra.mxu0 0.0
        %1333 = vmatpush.msra.mxu0 0.0
        %1334 = vmatpush.msra.mxu0 %v1275
        %1335 = vmatmul.f32.gmra.mxu0 %v1317
        %v1336 = vpop.f32.mrf.mxu0
        %v1337 = vadd.f32 0.0, %v1336
        %1338 = vdwg.mxu0
        %1339 = vst.msk [vmem:[#allocation2] sm:$0xff] %vm802, %v1337
        %1340 = vrot.lane.b32.xlu0 %v1244, 120
        %v1341 = vpop.permute.xlu0 %1340
        %1342 = vrot.lane.b32.xlu0 %v730, 88
        %v1343 = vpop.permute.xlu0 %1342
        %v1344 = vsel %vm802, %v1341, 0
        %v1346 = vsel %vm802, %v1343, 0
        %1348 = vmatpush.xpose.msra.mxu0 0.0
        %1349 = vmatpush.xpose.msra.mxu0 0.0
        %1350 = vmatpush.xpose.msra.mxu0 0.0
        %1351 = vmatpush.xpose.msra.mxu0 0.0
        %1352 = vmatpush.xpose.msra.mxu0 0.0
        %1353 = vmatpush.xpose.msra.mxu0 0.0
        %1354 = vmatpush.xpose.msra.mxu0 0.0
        %1355 = vmatpush.xpose.msra.mxu0 0.0
        %1356 = vmatpush.xpose.msra.mxu0 0.0
        %1357 = vmatpush.xpose.msra.mxu0 0.0
        %1358 = vmatpush.xpose.msra.mxu0 0.0
        %1359 = vmatpush.xpose.msra.mxu0 0.0
        %1360 = vmatpush.xpose.msra.mxu0 0.0
        %1361 = vmatpush.xpose.msra.mxu0 0.0
        %1362 = vmatpush.xpose.msra.mxu0 0.0
        %1363 = vmatpush.xpose.msra.mxu0 %v1346
        %1364 = vmatmul.f32.gmra.mxu0 %v1344
        %v1365 = vpop.f32.mrf.mxu0
        %v1366 = vadd.f32 0.0, %v1365
        %1367 = vdwg.mxu0
        %v1368 = vsel %vm802, %v1366, -inf
        %1369 = vmax.xlane.f32.xlu0 %v1368
        %v1370 = vpop.xlane.xlu0 %1369
        %v1371 = vsub.f32 %v1366, %v1370
        %v1372 = vmul.f32 %v1371, 1.442695
        %v1373 = vpow.pop %v1372
        %v1374 = vsel %vm802, %v1373, 0.0
        %1375 = vadd.xlane.f32.xlu0 %v1374
        %v1376 = vpop.xlane.xlu0 %1375
        %v1377 = vrcp.pop %v1376
        %v1378 = vmul.f32 %v1373, %v1377
        %1380 = vrot.lane.b32.xlu0 %v1275, 120
        %v1381 = vpop.permute.xlu0 %1380
        %v1384 = vsel %vm802, %v1378, 0
        %1386 = vmatpush.msra.mxu0 0.0
        %1387 = vmatpush.msra.mxu0 0.0
        %1388 = vmatpush.msra.mxu0 0.0
        %1389 = vmatpush.msra.mxu0 0.0
        %1390 = vmatpush.msra.mxu0 0.0
        %1391 = vmatpush.msra.mxu0 0.0
        %1392 = vmatpush.msra.mxu0 0.0
        %1393 = vmatpush.msra.mxu0 0.0
        %1394 = vmatpush.msra.mxu0 0.0
        %1395 = vmatpush.msra.mxu0 0.0
        %1396 = vmatpush.msra.mxu0 0.0
        %1397 = vmatpush.msra.mxu0 0.0
        %1398 = vmatpush.msra.mxu0 0.0
        %1399 = vmatpush.msra.mxu0 0.0
        %1400 = vmatpush.msra.mxu0 0.0
        %1401 = vmatpush.msra.mxu0 %v1381
        %1402 = vmatmul.f32.gmra.mxu0 %v1384
        %v1403 = vpop.f32.mrf.mxu0
        %v1404 = vadd.f32 0.0, %v1403
        %1405 = vdwg.mxu0
        %1407 = vrot.lane.b32.xlu0 %v1404, 8
        %v1408 = vpop.permute.xlu0 %1407
        %1410 = vst.msk [vmem:[#allocation2] sm:$0xff] %vm889, %v1408
        %1411 = vrot.lane.b32.xlu0 %v1244, 112
        %v1412 = vpop.permute.xlu0 %1411
        %1413 = vrot.lane.b32.xlu0 %v730, 80
        %v1414 = vpop.permute.xlu0 %1413
        %v1415 = vsel %vm802, %v1412, 0
        %v1417 = vsel %vm802, %v1414, 0
        %1419 = vmatpush.xpose.msra.mxu0 0.0
        %1420 = vmatpush.xpose.msra.mxu0 0.0
        %1421 = vmatpush.xpose.msra.mxu0 0.0
        %1422 = vmatpush.xpose.msra.mxu0 0.0
        %1423 = vmatpush.xpose.msra.mxu0 0.0
        %1424 = vmatpush.xpose.msra.mxu0 0.0
        %1425 = vmatpush.xpose.msra.mxu0 0.0
        %1426 = vmatpush.xpose.msra.mxu0 0.0
        %1427 = vmatpush.xpose.msra.mxu0 0.0
        %1428 = vmatpush.xpose.msra.mxu0 0.0
        %1429 = vmatpush.xpose.msra.mxu0 0.0
        %1430 = vmatpush.xpose.msra.mxu0 0.0
        %1431 = vmatpush.xpose.msra.mxu0 0.0
        %1432 = vmatpush.xpose.msra.mxu0 0.0
        %1433 = vmatpush.xpose.msra.mxu0 0.0
        %1434 = vmatpush.xpose.msra.mxu0 %v1417
        %1435 = vmatmul.f32.gmra.mxu0 %v1415
        %v1436 = vpop.f32.mrf.mxu0
        %v1437 = vadd.f32 0.0, %v1436
        %1438 = vdwg.mxu0
        %v1439 = vsel %vm802, %v1437, -inf
        %1440 = vmax.xlane.f32.xlu0 %v1439
        %v1441 = vpop.xlane.xlu0 %1440
        %v1442 = vsub.f32 %v1437, %v1441
        %v1443 = vmul.f32 %v1442, 1.442695
        %v1444 = vpow.pop %v1443
        %v1445 = vsel %vm802, %v1444, 0.0
        %1446 = vadd.xlane.f32.xlu0 %v1445
        %v1447 = vpop.xlane.xlu0 %1446
        %v1448 = vrcp.pop %v1447
        %v1449 = vmul.f32 %v1444, %v1448
        %1450 = vrot.lane.b32.xlu0 %v1275, 112
        %v1451 = vpop.permute.xlu0 %1450
        %v1454 = vsel %vm802, %v1449, 0
        %1456 = vmatpush.msra.mxu0 0.0
        %1457 = vmatpush.msra.mxu0 0.0
        %1458 = vmatpush.msra.mxu0 0.0
        %1459 = vmatpush.msra.mxu0 0.0
        %1460 = vmatpush.msra.mxu0 0.0
        %1461 = vmatpush.msra.mxu0 0.0
        %1462 = vmatpush.msra.mxu0 0.0
        %1463 = vmatpush.msra.mxu0 0.0
        %1464 = vmatpush.msra.mxu0 0.0
        %1465 = vmatpush.msra.mxu0 0.0
        %1466 = vmatpush.msra.mxu0 0.0
        %1467 = vmatpush.msra.mxu0 0.0
        %1468 = vmatpush.msra.mxu0 0.0
        %1469 = vmatpush.msra.mxu0 0.0
        %1470 = vmatpush.msra.mxu0 0.0
        %1471 = vmatpush.msra.mxu0 %v1451
        %1472 = vmatmul.f32.gmra.mxu0 %v1454
        %v1473 = vpop.f32.mrf.mxu0
        %v1474 = vadd.f32 0.0, %v1473
        %1475 = vdwg.mxu0
        %1477 = vrot.lane.b32.xlu0 %v1474, 16
        %v1478 = vpop.permute.xlu0 %1477
        %1480 = vst.msk [vmem:[#allocation2] sm:$0xff] %vm942, %v1478
        %1481 = vrot.lane.b32.xlu0 %v1244, 104
        %v1482 = vpop.permute.xlu0 %1481
        %1483 = vrot.lane.b32.xlu0 %v730, 72
        %v1484 = vpop.permute.xlu0 %1483
        %v1485 = vsel %vm802, %v1482, 0
        %v1487 = vsel %vm802, %v1484, 0
        %1489 = vmatpush.xpose.msra.mxu0 0.0
        %1490 = vmatpush.xpose.msra.mxu0 0.0
        %1491 = vmatpush.xpose.msra.mxu0 0.0
        %1492 = vmatpush.xpose.msra.mxu0 0.0
        %1493 = vmatpush.xpose.msra.mxu0 0.0
        %1494 = vmatpush.xpose.msra.mxu0 0.0
        %1495 = vmatpush.xpose.msra.mxu0 0.0
        %1496 = vmatpush.xpose.msra.mxu0 0.0
        %1497 = vmatpush.xpose.msra.mxu0 0.0
        %1498 = vmatpush.xpose.msra.mxu0 0.0
        %1499 = vmatpush.xpose.msra.mxu0 0.0
        %1500 = vmatpush.xpose.msra.mxu0 0.0
        %1501 = vmatpush.xpose.msra.mxu0 0.0
        %1502 = vmatpush.xpose.msra.mxu0 0.0
        %1503 = vmatpush.xpose.msra.mxu0 0.0
        %1504 = vmatpush.xpose.msra.mxu0 %v1487
        %1505 = vmatmul.f32.gmra.mxu0 %v1485
        %v1506 = vpop.f32.mrf.mxu0
        %v1507 = vadd.f32 0.0, %v1506
        %1508 = vdwg.mxu0
        %v1509 = vsel %vm802, %v1507, -inf
        %1510 = vmax.xlane.f32.xlu0 %v1509
        %v1511 = vpop.xlane.xlu0 %1510
        %v1512 = vsub.f32 %v1507, %v1511
        %v1513 = vmul.f32 %v1512, 1.442695
        %v1514 = vpow.pop %v1513
        %v1515 = vsel %vm802, %v1514, 0.0
        %1516 = vadd.xlane.f32.xlu0 %v1515
        %v1517 = vpop.xlane.xlu0 %1516
        %v1518 = vrcp.pop %v1517
        %v1519 = vmul.f32 %v1514, %v1518
        %1520 = vrot.lane.b32.xlu0 %v1275, 104
        %v1521 = vpop.permute.xlu0 %1520
        %v1524 = vsel %vm802, %v1519, 0
        %1526 = vmatpush.msra.mxu0 0.0
        %1527 = vmatpush.msra.mxu0 0.0
        %1528 = vmatpush.msra.mxu0 0.0
        %1529 = vmatpush.msra.mxu0 0.0
        %1530 = vmatpush.msra.mxu0 0.0
        %1531 = vmatpush.msra.mxu0 0.0
        %1532 = vmatpush.msra.mxu0 0.0
        %1533 = vmatpush.msra.mxu0 0.0
        %1534 = vmatpush.msra.mxu0 0.0
        %1535 = vmatpush.msra.mxu0 0.0
        %1536 = vmatpush.msra.mxu0 0.0
        %1537 = vmatpush.msra.mxu0 0.0
        %1538 = vmatpush.msra.mxu0 0.0
        %1539 = vmatpush.msra.mxu0 0.0
        %1540 = vmatpush.msra.mxu0 0.0
        %1541 = vmatpush.msra.mxu0 %v1521
        %1542 = vmatmul.f32.gmra.mxu0 %v1524
        %v1543 = vpop.f32.mrf.mxu0
        %v1544 = vadd.f32 0.0, %v1543
        %1545 = vdwg.mxu0
        %1547 = vrot.lane.b32.xlu0 %v1544, 24
        %v1548 = vpop.permute.xlu0 %1547
        %1550 = vst.msk [vmem:[#allocation2] sm:$0xff] %vm995, %v1548
        %v1551 = vld [vmem:[#allocation2] sm:$0xff]
        %v1552 = vld [vmem:[#allocation15] sm:$0xff]
        %v1553 = vld [vmem:[#allocation15 + $0x8] sm:$0xff]
        %v1554 = vld [vmem:[#allocation15 + $0x10] sm:$0xff]
        %v1555 = vld [vmem:[#allocation15 + $0x18] sm:$0xff]
        %v1556 = vld [vmem:[%s14] sm:$0x1]
        %v1558 = vperm.slane %v1556, 0
        %v1561 = vsel %vm700, %v1551, 0
        %1563 = vmatpush.msra.mxu0 0.0
        %1564 = vmatpush.msra.mxu0 0.0
        %1565 = vmatpush.msra.mxu0 0.0
        %1566 = vmatpush.msra.mxu0 0.0
        %1567 = vmatpush.msra.mxu0 0.0
        %1568 = vmatpush.msra.mxu0 0.0
        %1569 = vmatpush.msra.mxu0 0.0
        %1570 = vmatpush.msra.mxu0 0.0
        %1571 = vmatpush.msra.mxu0 0.0
        %1572 = vmatpush.msra.mxu0 0.0
        %1573 = vmatpush.msra.mxu0 0.0
        %1574 = vmatpush.msra.mxu0 0.0
        %1575 = vmatpush.msra.mxu0 %v1555
        %1576 = vmatpush.msra.mxu0 %v1554
        %1577 = vmatpush.msra.mxu0 %v1553
        %1578 = vmatpush.msra.mxu0 %v1552
        %1579 = vmatmul.f32.gmra.mxu0 %v1561
        %v1580 = vpop.f32.mrf.mxu0
        %v1581 = vadd.f32 %v1558, %v1580
        %1582 = vdwg.mxu0
        %1583 = vst.msk [vmem:[%s691] sm:$0xff] %vm700, %v1581
        %s1584 = sand.u32 %s383, 1
        %s1585 = scalar_lea.sflag [#allocation5], %s1584
        %s1586 = sand.u32 %s383, 1
        %s1587 = smul.addr %s1586, 8
        %s1588 = scalar_lea.vmem [#allocation17], %s1587
        // Predicated region
        $region113: #{graph_encoder_decoder_attention.1} parent=79 // pred_check
          %p1589 = pneg %p393
        $region114: #{graph_encoder_decoder_attention.1} parent=79 // pred_check_branch
          %1591 = sbr.rel (%p1589) target = $region116
        $region115: #{graph_encoder_decoder_attention.1} parent=79 // pred_region
          %1593 = vsyncadd %s1585, 0
          %s1594 = smul.addr %s40, 8
          %s1595 = scalar_lea.hbm %s15, %s1594
          %s1597 = sshll.u32 %s1588, 4
          %s1598 = int_to_ptr.vmem [resolvable:$true] %s1597
          %s1599 = sshll.u32 %s1595, 4
          %s1600 = int_to_ptr.hbm [resolvable:$true] %s1599
          %1602 = dma.vmem_to_hbm [thread:$0]  %s1598, 128, %s1600, %s1585
        $region116: #{graph_encoder_decoder_attention.1} parent=79 // pred_fallthru
          _
      $region80: #{graph_encoder_decoder_attention.1} parent=5 // pred_fallthru
        _
      %p1603 = scmp.le.s32.totalorder 2, %s35
      // Predicated region
      $region117: #{graph_encoder_decoder_attention.1} parent=5 // pred_check
        %p1604 = pneg %p1603
      $region118: #{graph_encoder_decoder_attention.1} parent=5 // pred_check_branch
        %1606 = sbr.rel (%p1604) target = $region120
      $region119: #{graph_encoder_decoder_attention.1} parent=5 // pred_region
        %s1607 = ssub.s32 %s35, 2
        // Predicated region
        $region121: #{graph_encoder_decoder_attention.1} parent=119 // pred_check
          %p1608 = pneg %p399
        $region122: #{graph_encoder_decoder_attention.1} parent=119 // pred_check_branch
          %1610 = sbr.rel (%p1608) target = $region124
        $region123: #{graph_encoder_decoder_attention.1} parent=119 // pred_region
          %s1611 = sand.u32 %s384, 1
          %s1612 = scalar_lea.sflag [#allocation5], %s1611
          %s1613 = sand.u32 %s384, 1
          %s1614 = smul.addr %s1613, 8
          %s1615 = scalar_lea.vmem [#allocation17], %s1614
          %1617 = dma.done %s1612, 128
        $region124: #{graph_encoder_decoder_attention.1} parent=119 // pred_fallthru
          _
      $region120: #{graph_encoder_decoder_attention.1} parent=5 // pred_fallthru
        _
    $region6: #{graph_encoder_decoder_attention.1} parent=1 // loop_footer
      %s39 = sadd.s32 1, %s35
    $region7: #{graph_encoder_decoder_attention.1} parent=1 // loop_footer_branch
      %34 = sbr.rel target = $region3
    $region8: #{graph_encoder_decoder_attention.1} parent=1 // loop_exit
      _
    %1618 = vsyncpa [#allocation4], 1
    %s1619 = scalar_lea.sflag [#allocation4], 1
    %1620 = vsyncpa %s1619, 1
    %1621 = vsyncpa [#allocation7], 1
    %s1622 = scalar_lea.sflag [#allocation7], 1
    %1623 = vsyncpa %s1622, 1
    %1624 = vsyncpa [#allocation10], 1
    %s1625 = scalar_lea.sflag [#allocation10], 1
    %1626 = vsyncpa %s1625, 1
    %1627 = vsyncpa [#allocation13], 1
    %1628 = vsyncpa [#allocation16], 1
    %1629 = vsyncpa [#allocation5], 1
    %s1630 = scalar_lea.sflag [#allocation5], 1
    %1631 = vsyncpa %s1630, 1

</llo_original>
